<compile_context>
chip_gen: v5e
topology: v5e:2x2
jax: 0.10.0
libtpu: 0.0.40
codegen_flags: <defaults>
</compile_context>

<pallas_src>
import jax
import jax.numpy as jnp
import numpy as np
from jax.experimental import pallas as pl
from jax.experimental.pallas import tpu as pltpu

LANE = 128          # TPU vreg lane width
MAX_TILE_B = 4096   # per-step batch-tile ceiling (safe vs. default scoped VMEM)


def _round_up(n, m):
    return (n + m - 1) // m * m


def _pad2d(a, rows, cols):
    r, c = a.shape
    return jnp.pad(a, ((0, rows - r), (0, cols - c)))


def _min_grid_steps():
    """>=2 grid steps on dual-TC v7x so both TensorCores get work; 1 elsewhere."""
    try:
        kind = jax.devices()[0].device_kind.lower()
    except Exception:
        return 1
    return 2 if "v7" in kind else 1


def _pick_tile_b(batch):
    steps = _min_grid_steps()
    tile = _round_up(pl.cdiv(batch, steps), 8)
    while tile > MAX_TILE_B:
        steps *= 2
        tile = _round_up(pl.cdiv(batch, steps), 8)
    return tile


# ----------------------------- Pallas kernel -------------------------------

def _discriminator_kernel(x_ref,
                          w0_ref, b0_ref,
                          w1_ref, b1_ref,
                          w2_ref, b2_ref,
                          out_ref):
    # hidden layer 0: Linear + ReLU   (MXU, f32 accumulation)
    h = jnp.dot(x_ref[...], w0_ref[...],
                preferred_element_type=jnp.float32) + b0_ref[...]
    h = jnp.maximum(h, 0.0)

    # hidden layer 1: Linear + ReLU
    h = jnp.dot(h.astype(w1_ref.dtype), w1_ref[...],
                preferred_element_type=jnp.float32) + b1_ref[...]
    h = jnp.maximum(h, 0.0)

    # output layer: Linear(h1 -> 1) on the MXU.  w2_ref is (H1p, 128) with the
    # real weight column in lane 0 and zeros elsewhere; b2 is an SMEM scalar.
    logits = jnp.dot(h.astype(w2_ref.dtype), w2_ref[...],
                     preferred_element_type=jnp.float32) + b2_ref[0, 0]

    # narrow (tile_b, 1) store: HBM writeback is tiny.
    out_ref[...] = jax.nn.sigmoid(logits[:, :1]).astype(out_ref.dtype)


# ------------------------- one-time parameter prep ---------------------------

def prepare_discriminator_params(params, compute_dtype=jnp.float32):
    """Pad/cast weights once (hoisted out of the per-call forward path).

    Returns a dict of device arrays only (jit/pytree friendly):
      w0:(Z,H0p)  b0:(1,H0p)  w1:(H0p,H1p)  b1:(1,H1p)  w2:(H1p,128)  b2:(1,1)
    """
    w0, b0 = params["w0"], params["b0"]
    w1, b1 = params["w1"], params["b1"]
    w2, b2 = params["w2"], params["b2"]
    Z, H0 = w0.shape
    H1 = w1.shape[1]
    H0p = _round_up(H0, LANE)
    H1p = _round_up(H1, LANE)
    return {
        "w0": _pad2d(w0, Z, H0p).astype(compute_dtype),
        "b0": _pad2d(b0, 1, H0p).astype(jnp.float32),
        "w1": _pad2d(w1, H0p, H1p).astype(compute_dtype),
        "b1": _pad2d(b1, 1, H1p).astype(jnp.float32),
        "w2": _pad2d(w2, H1p, LANE).astype(compute_dtype),  # col 0 = w2
        "b2": b2.reshape(1, 1).astype(jnp.float32),          # SMEM scalar
    }


# ------------------------------- forward ------------------------------------

def discriminator_forward(x, prepared, *, tile_b=None):
    """x: (B, z_dim) f32. prepared: output of prepare_discriminator_params."""
    B, Z = x.shape
    w0, b0 = prepared["w0"], prepared["b0"]
    w1, b1 = prepared["w1"], prepared["b1"]
    w2, b2 = prepared["w2"], prepared["b2"]
    compute_dtype = w0.dtype
    H0p, H1p = w0.shape[1], w1.shape[1]
    assert w0.shape[0] == Z

    if tile_b is None:
        tile_b = _pick_tile_b(B)
    tile_b = min(_round_up(tile_b, 8), _round_up(B, 8))
    Bp = _round_up(B, tile_b)

    # Only x is padded / cast per call (weights were prepared once).
    x_p = _pad2d(x, Bp, Z).astype(compute_dtype)

    grid = (Bp // tile_b,)

    def resident(shape):  # full-block VMEM resident (constant block index)
        return pl.BlockSpec(shape, lambda i: (0, 0))

    itemsize = jnp.dtype(compute_dtype).itemsize
    cost = pl.CostEstimate(
        flops=2 * Bp * (Z * H0p + H0p * H1p + H1p * LANE),
        transcendentals=Bp,
        bytes_accessed=(x_p.size * itemsize
                        + (w0.size + w1.size + w2.size) * itemsize
                        + (b0.size + b1.size + b2.size) * 4
                        + Bp * 4),
    )

    out = pl.pallas_call(
        _discriminator_kernel,
        out_shape=jax.ShapeDtypeStruct((Bp, 1), jnp.float32),
        grid=grid,
        in_specs=[
            pl.BlockSpec((tile_b, Z), lambda i: (i, 0)),        # x (tiled)
            resident((Z, H0p)), resident((1, H0p)),             # layer 0
            resident((H0p, H1p)), resident((1, H1p)),           # layer 1
            resident((H1p, LANE)),                              # w2 (col 0)
            pl.BlockSpec((1, 1), lambda i: (0, 0),
                         memory_space=pltpu.MemorySpace.SMEM),  # b2 scalar
        ],
        out_specs=pl.BlockSpec((tile_b, 1), lambda i: (i, 0)),
        compiler_params=pltpu.CompilerParams(
            dimension_semantics=("parallel",)),
        cost_estimate=cost,
    )(x_p, w0, b0, w1, b1, w2, b2)

    return out if Bp == B else out[:B]


# ------------------------- deterministic parameters ------------------------

def _init_linear(key, in_dim, out_dim):
    """Mimic torch.nn.Linear default init: U(-1/sqrt(in), 1/sqrt(in))."""
    kw, kb = jax.random.split(key)
    bound = 1.0 / np.sqrt(in_dim)
    # weight stored already transposed: (in_dim, out_dim)
    w = jax.random.uniform(kw, (in_dim, out_dim), jnp.float32, -bound, bound)
    b = jax.random.uniform(kb, (1, out_dim), jnp.float32, -bound, bound)
    return w, b


def make_discriminator_params(key, z_dim, hidden_dims):
    """Discriminator(dims=[z_dim, hidden_dims], out_activation='Sigmoid')."""
    dims = [z_dim] + list(hidden_dims)
    keys = jax.random.split(key, len(dims))
    params = {}
    for i in range(1, len(dims)):          # hidden layers
        w, b = _init_linear(keys[i - 1], dims[i - 1], dims[i])
        params[f"w{i-1}"] = w
        params[f"b{i-1}"] = b
    w, b = _init_linear(keys[-1], dims[-1], 1)   # output layer (-> 1)
    params[f"w{len(dims)-1}"] = w
    params[f"b{len(dims)-1}"] = b
    return params


# ----------------------------- pure-JAX reference ---------------------------

def discriminator_ref(x, params):
    h = jnp.maximum(x @ params["w0"] + params["b0"], 0.0)
    h = jnp.maximum(h @ params["w1"] + params["b1"], 0.0)
    return jax.nn.sigmoid(h @ params["w2"] + params["b2"])


# ----------------------------------- main -----------------------------------

if __name__ == "__main__":
    # Discriminator(dims=[16, [64, 32]], out_activation='Sigmoid')
    # TODO(synk): batch_norm=True / dropout>0 branches of build_network are not
    # implemented (reference module defaults them off).
    B, Z_DIM = 512, 16
    HIDDEN = [64, 32]

    key = jax.random.PRNGKey(0)
    kx, kp = jax.random.split(key)

    x = jax.random.normal(kx, (B, Z_DIM), jnp.float32)
    params = make_discriminator_params(kp, Z_DIM, HIDDEN)

    # One-time weight padding / casting, then a jitted forward over (x, params).
    prepared = prepare_discriminator_params(params, compute_dtype=jnp.float32)
    forward = jax.jit(discriminator_forward)

    out = forward(x, prepared)
    out = jax.block_until_ready(out)

    ref = discriminator_ref(x, params)
    assert out.shape == (B, 1), out.shape
    np.testing.assert_allclose(np.asarray(out), np.asarray(ref),
                               rtol=1e-5, atol=2e-5)

    print("KERNEL_OK")
</pallas_src>

<mosaic_0001>
module attributes {stable_mosaic.version = 11 : i64} {
  func.func @_discriminator_kernel(%arg0: i32, %arg1: memref<512x16xf32, #tpu.memory_space<vmem>>, %arg2: memref<16x128xf32, #tpu.memory_space<vmem>>, %arg3: memref<1x128xf32, #tpu.memory_space<vmem>>, %arg4: memref<128x128xf32, #tpu.memory_space<vmem>>, %arg5: memref<1x128xf32, #tpu.memory_space<vmem>>, %arg6: memref<128x128xf32, #tpu.memory_space<vmem>>, %arg7: memref<1x1xf32, #tpu.memory_space<smem>>, %arg8: memref<512x1xf32, #tpu.memory_space<vmem>>) attributes {dimension_semantics = [#tpu.dimension_semantics<parallel>], iteration_bounds = array<i64: 1>, scalar_prefetch = 0 : i64, scratch_operands = 0 : i64, tpu.core_type = #tpu.core_type<tc>, window_params = [{transform_indices = @transform_0, window_bounds = array<i64: 512, 16>}, {pipeline_mode = #tpu.pipeline_mode<synchronous>, transform_indices = @transform_1, window_bounds = array<i64: 16, 128>}, {pipeline_mode = #tpu.pipeline_mode<synchronous>, transform_indices = @transform_2, window_bounds = array<i64: 1, 128>}, {pipeline_mode = #tpu.pipeline_mode<synchronous>, transform_indices = @transform_3, window_bounds = array<i64: 128, 128>}, {pipeline_mode = #tpu.pipeline_mode<synchronous>, transform_indices = @transform_4, window_bounds = array<i64: 1, 128>}, {pipeline_mode = #tpu.pipeline_mode<synchronous>, transform_indices = @transform_5, window_bounds = array<i64: 128, 128>}, {transform_indices = @transform_6, window_bounds = array<i64: 1, 1>}, {transform_indices = @transform_7, window_bounds = array<i64: 512, 1>}]} {
    %c0 = arith.constant 0 : index
    %c0_0 = arith.constant 0 : index
    %0 = vector.load %arg1[%c0, %c0_0] : memref<512x16xf32, #tpu.memory_space<vmem>>, vector<512x16xf32>
    %c0_1 = arith.constant 0 : index
    %c0_2 = arith.constant 0 : index
    %1 = vector.load %arg2[%c0_1, %c0_2] : memref<16x128xf32, #tpu.memory_space<vmem>>, vector<16x128xf32>
    %cst = arith.constant dense<0.000000e+00> : vector<512x128xf32>
    %2 = tpu.matmul %0, %1, %cst {dimension_numbers = #tpu.dot_dimension_numbers<[1], [0], [0], [1], [0, 0, 1, 1], [], []>} : vector<512x16xf32>, vector<16x128xf32>, vector<512x128xf32> -> vector<512x128xf32>
    %c0_3 = arith.constant 0 : index
    %c0_4 = arith.constant 0 : index
    %3 = vector.load %arg3[%c0_3, %c0_4] : memref<1x128xf32, #tpu.memory_space<vmem>>, vector<1x128xf32>
    %4 = vector.broadcast %3 : vector<1x128xf32> to vector<512x128xf32>
    %5 = arith.addf %2, %4 : vector<512x128xf32>
    %cst_5 = arith.constant 0.000000e+00 : f32
    %6 = vector.broadcast %cst_5 : f32 to vector<512x128xf32>
    %7 = arith.maximumf %5, %6 : vector<512x128xf32>
    %c0_6 = arith.constant 0 : index
    %c0_7 = arith.constant 0 : index
    %8 = vector.load %arg4[%c0_6, %c0_7] : memref<128x128xf32, #tpu.memory_space<vmem>>, vector<128x128xf32>
    %cst_8 = arith.constant dense<0.000000e+00> : vector<512x128xf32>
    %9 = tpu.matmul %7, %8, %cst_8 {dimension_numbers = #tpu.dot_dimension_numbers<[1], [0], [0], [1], [0, 0, 1, 1], [], []>} : vector<512x128xf32>, vector<128x128xf32>, vector<512x128xf32> -> vector<512x128xf32>
    %c0_9 = arith.constant 0 : index
    %c0_10 = arith.constant 0 : index
    %10 = vector.load %arg5[%c0_9, %c0_10] : memref<1x128xf32, #tpu.memory_space<vmem>>, vector<1x128xf32>
    %11 = vector.broadcast %10 : vector<1x128xf32> to vector<512x128xf32>
    %12 = arith.addf %9, %11 : vector<512x128xf32>
    %cst_11 = arith.constant 0.000000e+00 : f32
    %13 = vector.broadcast %cst_11 : f32 to vector<512x128xf32>
    %14 = arith.maximumf %12, %13 : vector<512x128xf32>
    %c0_12 = arith.constant 0 : index
    %c0_13 = arith.constant 0 : index
    %15 = vector.load %arg6[%c0_12, %c0_13] : memref<128x128xf32, #tpu.memory_space<vmem>>, vector<128x128xf32>
    %cst_14 = arith.constant dense<0.000000e+00> : vector<512x128xf32>
    %16 = tpu.matmul %14, %15, %cst_14 {dimension_numbers = #tpu.dot_dimension_numbers<[1], [0], [0], [1], [0, 0, 1, 1], [], []>} : vector<512x128xf32>, vector<128x128xf32>, vector<512x128xf32> -> vector<512x128xf32>
    %c0_15 = arith.constant 0 : index
    %c0_16 = arith.constant 0 : index
    %17 = memref.load %arg7[%c0_15, %c0_16] : memref<1x1xf32, #tpu.memory_space<smem>>
    %18 = vector.broadcast %17 : f32 to vector<512x128xf32>
    %19 = arith.addf %16, %18 : vector<512x128xf32>
    %20 = vector.extract_strided_slice %19 {offsets = [0, 0], sizes = [512, 1], strides = [1, 1]} : vector<512x128xf32> to vector<512x1xf32>
    %21 = arith.negf %20 : vector<512x1xf32>
    %22 = math.exp %21 : vector<512x1xf32>
    %cst_17 = arith.constant 1.000000e+00 : f32
    %23 = vector.broadcast %cst_17 : f32 to vector<512x1xf32>
    %24 = arith.addf %23, %22 : vector<512x1xf32>
    %25 = arith.divf %23, %24 : vector<512x1xf32>
    %c0_18 = arith.constant 0 : index
    %c0_19 = arith.constant 0 : index
    %26 = vector.load %arg8[%c0_18, %c0_19] : memref<512x1xf32, #tpu.memory_space<vmem>>, vector<512x1xf32>
    tpu.vector_store %arg8[%c0_18, %c0_19], %25 {strides = array<i32>} : memref<512x1xf32, #tpu.memory_space<vmem>>, vector<512x1xf32>,
    return
  }
  func.func @transform_0(%arg0: i32) -> (i32, i32) {
    %c0_i32 = arith.constant 0 : i32
    %c0_i32_0 = arith.constant 0 : i32
    return %arg0, %c0_i32 : i32, i32
  }
  func.func @transform_1(%arg0: i32) -> (i32, i32) {
    %c0_i32 = arith.constant 0 : i32
    %c0_i32_0 = arith.constant 0 : i32
    %c0_i32_1 = arith.constant 0 : i32
    return %c0_i32, %c0_i32_0 : i32, i32
  }
  func.func @transform_2(%arg0: i32) -> (i32, i32) {
    %c0_i32 = arith.constant 0 : i32
    %c0_i32_0 = arith.constant 0 : i32
    %c0_i32_1 = arith.constant 0 : i32
    return %c0_i32, %c0_i32_0 : i32, i32
  }
  func.func @transform_3(%arg0: i32) -> (i32, i32) {
    %c0_i32 = arith.constant 0 : i32
    %c0_i32_0 = arith.constant 0 : i32
    %c0_i32_1 = arith.constant 0 : i32
    return %c0_i32, %c0_i32_0 : i32, i32
  }
  func.func @transform_4(%arg0: i32) -> (i32, i32) {
    %c0_i32 = arith.constant 0 : i32
    %c0_i32_0 = arith.constant 0 : i32
    %c0_i32_1 = arith.constant 0 : i32
    return %c0_i32, %c0_i32_0 : i32, i32
  }
  func.func @transform_5(%arg0: i32) -> (i32, i32) {
    %c0_i32 = arith.constant 0 : i32
    %c0_i32_0 = arith.constant 0 : i32
    %c0_i32_1 = arith.constant 0 : i32
    return %c0_i32, %c0_i32_0 : i32, i32
  }
  func.func @transform_6(%arg0: i32) -> (i32, i32) {
    %c0_i32 = arith.constant 0 : i32
    %c0_i32_0 = arith.constant 0 : i32
    %c0_i32_1 = arith.constant 0 : i32
    return %c0_i32, %c0_i32_0 : i32, i32
  }
  func.func @transform_7(%arg0: i32) -> (i32, i32) {
    %c0_i32 = arith.constant 0 : i32
    %c0_i32_0 = arith.constant 0 : i32
    return %arg0, %c0_i32 : i32, i32
  }
}

</mosaic_0001>

<llo_original>
// kernel: discriminator_forward.1
$region0: #{discriminator_forward.1}
  #allocation0 [shape = 'u32[]', space=smem, size = 0x4, offset = 0x4, fixed_abs, tag = 'smem constant byte address 0x4 - core index']
  #allocation1 [shape = 'u32[72,128]{1,0:T(1,128)}', space=vmem, size = 0x9000, scoped, tag = 'internal scratch']
  #allocation2 [shape = 'f32[1,1]{1,0:T(1,128)S(6)}', space=smem, size = 0x200, scoped, tag = 'scoped memory for discriminator_forward.1']
  %s0 = inlined_call_operand.vmem [shape: f32[512,16], index: 0, kind: input, shape index: {}]
  %s1 = inlined_call_operand.vmem [shape: f32[16,128], index: 1, kind: input, shape index: {}]
  %s2 = inlined_call_operand.vmem [shape: f32[1,128], index: 2, kind: input, shape index: {}]
  %s3 = inlined_call_operand.vmem [shape: f32[128,128], index: 3, kind: input, shape index: {}]
  %s4 = inlined_call_operand.vmem [shape: f32[1,128], index: 4, kind: input, shape index: {}]
  %s5 = inlined_call_operand.vmem [shape: f32[128,128], index: 5, kind: input, shape index: {}]
  %s6 = inlined_call_operand.<no memory space> [shape: f32[1,1], index: 6, kind: input, shape index: {}]
  %s7 = inlined_call_operand.vmem [shape: f32[512,1], index: 7, kind: output, shape index: {}]
  %s8 = sld [smem:[#allocation0]]
  $region38: #{discriminator_forward.1} parent=0
    _
  %s10 = ssub.s32 1, %s8
  %s11 = scalar_select 0, %s10, %s8
  %12 = sst [smem:[#allocation2]] %s6
  // Predicated region
  $region2: #{discriminator_forward.1} parent=0 // pred_check
    _
  $region3: #{discriminator_forward.1} parent=0 // pred_check_branch
    %14 = sbr.rel (0) target = $region5
  $region4: #{discriminator_forward.1} parent=0 // pred_region
    _
  $region5: #{discriminator_forward.1} parent=0 // pred_fallthru
    _
  // Predicated region
  $region6: #{discriminator_forward.1} parent=0 // pred_check
    _
  $region7: #{discriminator_forward.1} parent=0 // pred_check_branch
    %16 = sbr.rel (0) target = $region9
  $region8: #{discriminator_forward.1} parent=0 // pred_region
    _
  $region9: #{discriminator_forward.1} parent=0 // pred_fallthru
    _
  // Predicated region
  $region10: #{discriminator_forward.1} parent=0 // pred_check
    _
  $region11: #{discriminator_forward.1} parent=0 // pred_check_branch
    %18 = sbr.rel (0) target = $region13
  $region12: #{discriminator_forward.1} parent=0 // pred_region
    _
  $region13: #{discriminator_forward.1} parent=0 // pred_fallthru
    _
  // Predicated region
  $region14: #{discriminator_forward.1} parent=0 // pred_check
    _
  $region15: #{discriminator_forward.1} parent=0 // pred_check_branch
    %20 = sbr.rel (0) target = $region17
  $region16: #{discriminator_forward.1} parent=0 // pred_region
    _
  $region17: #{discriminator_forward.1} parent=0 // pred_fallthru
    _
  // Predicated region
  $region18: #{discriminator_forward.1} parent=0 // pred_check
    _
  $region19: #{discriminator_forward.1} parent=0 // pred_check_branch
    %22 = sbr.rel (0) target = $region21
  $region20: #{discriminator_forward.1} parent=0 // pred_region
    _
  $region21: #{discriminator_forward.1} parent=0 // pred_fallthru
    _
  // Predicated region
  $region22: #{discriminator_forward.1} parent=0 // pred_check
    _
  $region23: #{discriminator_forward.1} parent=0 // pred_check_branch
    %24 = sbr.rel (0) target = $region25
  $region24: #{discriminator_forward.1} parent=0 // pred_region
    _
  $region25: #{discriminator_forward.1} parent=0 // pred_fallthru
    _
  // Predicated region
  $region26: #{discriminator_forward.1} parent=0 // pred_check
    _
  $region27: #{discriminator_forward.1} parent=0 // pred_check_branch
    %26 = sbr.rel (0) target = $region29
  $region28: #{discriminator_forward.1} parent=0 // pred_region
    _
  $region29: #{discriminator_forward.1} parent=0 // pred_fallthru
    _
  %v27 = vld [vmem:[%s0] sm:$0xff]
  %v28 = vld [vmem:[%s0 + $0x8] sm:$0xff]
  %v29 = vld [vmem:[%s0 + $0x10] sm:$0xff]
  %v30 = vld [vmem:[%s0 + $0x18] sm:$0xff]
  %v31 = vld [vmem:[%s0 + $0x20] sm:$0xff]
  %v32 = vld [vmem:[%s0 + $0x28] sm:$0xff]
  %v33 = vld [vmem:[%s0 + $0x30] sm:$0xff]
  %v34 = vld [vmem:[%s0 + $0x38] sm:$0xff]
  %v35 = vld [vmem:[%s0 + $0x40] sm:$0xff]
  %v36 = vld [vmem:[%s0 + $0x48] sm:$0xff]
  %v37 = vld [vmem:[%s0 + $0x50] sm:$0xff]
  %v38 = vld [vmem:[%s0 + $0x58] sm:$0xff]
  %v39 = vld [vmem:[%s0 + $0x60] sm:$0xff]
  %v40 = vld [vmem:[%s0 + $0x68] sm:$0xff]
  %v41 = vld [vmem:[%s0 + $0x70] sm:$0xff]
  %v42 = vld [vmem:[%s0 + $0x78] sm:$0xff]
  %v43 = vld [vmem:[%s0 + $0x80] sm:$0xff]
  %v44 = vld [vmem:[%s0 + $0x88] sm:$0xff]
  %v45 = vld [vmem:[%s0 + $0x90] sm:$0xff]
  %v46 = vld [vmem:[%s0 + $0x98] sm:$0xff]
  %v47 = vld [vmem:[%s0 + $0xa0] sm:$0xff]
  %v48 = vld [vmem:[%s0 + $0xa8] sm:$0xff]
  %v49 = vld [vmem:[%s0 + $0xb0] sm:$0xff]
  %v50 = vld [vmem:[%s0 + $0xb8] sm:$0xff]
  %v51 = vld [vmem:[%s0 + $0xc0] sm:$0xff]
  %v52 = vld [vmem:[%s0 + $0xc8] sm:$0xff]
  %v53 = vld [vmem:[%s0 + $0xd0] sm:$0xff]
  %v54 = vld [vmem:[%s0 + $0xd8] sm:$0xff]
  %v55 = vld [vmem:[%s0 + $0xe0] sm:$0xff]
  %v56 = vld [vmem:[%s0 + $0xe8] sm:$0xff]
  %v57 = vld [vmem:[%s0 + $0xf0] sm:$0xff]
  %v58 = vld [vmem:[%s0 + $0xf8] sm:$0xff]
  %v59 = vld [vmem:[%s0 + $0x100] sm:$0xff]
  %v60 = vld [vmem:[%s0 + $0x108] sm:$0xff]
  %v61 = vld [vmem:[%s0 + $0x110] sm:$0xff]
  %v62 = vld [vmem:[%s0 + $0x118] sm:$0xff]
  %v63 = vld [vmem:[%s0 + $0x120] sm:$0xff]
  %v64 = vld [vmem:[%s0 + $0x128] sm:$0xff]
  %v65 = vld [vmem:[%s0 + $0x130] sm:$0xff]
  %v66 = vld [vmem:[%s0 + $0x138] sm:$0xff]
  %v67 = vld [vmem:[%s0 + $0x140] sm:$0xff]
  %v68 = vld [vmem:[%s0 + $0x148] sm:$0xff]
  %v69 = vld [vmem:[%s0 + $0x150] sm:$0xff]
  %v70 = vld [vmem:[%s0 + $0x158] sm:$0xff]
  %v71 = vld [vmem:[%s0 + $0x160] sm:$0xff]
  %v72 = vld [vmem:[%s0 + $0x168] sm:$0xff]
  %v73 = vld [vmem:[%s0 + $0x170] sm:$0xff]
  %v74 = vld [vmem:[%s0 + $0x178] sm:$0xff]
  %v75 = vld [vmem:[%s0 + $0x180] sm:$0xff]
  %v76 = vld [vmem:[%s0 + $0x188] sm:$0xff]
  %v77 = vld [vmem:[%s0 + $0x190] sm:$0xff]
  %v78 = vld [vmem:[%s0 + $0x198] sm:$0xff]
  %v79 = vld [vmem:[%s0 + $0x1a0] sm:$0xff]
  %v80 = vld [vmem:[%s0 + $0x1a8] sm:$0xff]
  %v81 = vld [vmem:[%s0 + $0x1b0] sm:$0xff]
  %v82 = vld [vmem:[%s0 + $0x1b8] sm:$0xff]
  %v83 = vld [vmem:[%s0 + $0x1c0] sm:$0xff]
  %v84 = vld [vmem:[%s0 + $0x1c8] sm:$0xff]
  %v85 = vld [vmem:[%s0 + $0x1d0] sm:$0xff]
  %v86 = vld [vmem:[%s0 + $0x1d8] sm:$0xff]
  %v87 = vld [vmem:[%s0 + $0x1e0] sm:$0xff]
  %v88 = vld [vmem:[%s0 + $0x1e8] sm:$0xff]
  %v89 = vld [vmem:[%s0 + $0x1f0] sm:$0xff]
  %v90 = vld [vmem:[%s0 + $0x1f8] sm:$0xff]
  %v91 = vld [vmem:[%s1] sm:$0xff]
  %v92 = vld [vmem:[%s1 + $0x8] sm:$0xff]
  %v93 = vld [vmem:[%s2] sm:$0x1]
  %v95 = vperm.slane %v93, 0
  %vm97 = vcmask 130048
  %v99 = vsel %vm97, %v27, 0
  %v102 = vsel %vm97, %v28, 0
  %v105 = vsel %vm97, %v29, 0
  %v108 = vsel %vm97, %v30, 0
  %v111 = vsel %vm97, %v31, 0
  %v114 = vsel %vm97, %v32, 0
  %v117 = vsel %vm97, %v33, 0
  %v120 = vsel %vm97, %v34, 0
  %v123 = vsel %vm97, %v35, 0
  %v126 = vsel %vm97, %v36, 0
  %v129 = vsel %vm97, %v37, 0
  %v132 = vsel %vm97, %v38, 0
  %v135 = vsel %vm97, %v39, 0
  %v138 = vsel %vm97, %v40, 0
  %v141 = vsel %vm97, %v41, 0
  %v144 = vsel %vm97, %v42, 0
  %v147 = vsel %vm97, %v43, 0
  %v150 = vsel %vm97, %v44, 0
  %v153 = vsel %vm97, %v45, 0
  %v156 = vsel %vm97, %v46, 0
  %v159 = vsel %vm97, %v47, 0
  %v162 = vsel %vm97, %v48, 0
  %v165 = vsel %vm97, %v49, 0
  %v168 = vsel %vm97, %v50, 0
  %v171 = vsel %vm97, %v51, 0
  %v174 = vsel %vm97, %v52, 0
  %v177 = vsel %vm97, %v53, 0
  %v180 = vsel %vm97, %v54, 0
  %v183 = vsel %vm97, %v55, 0
  %v186 = vsel %vm97, %v56, 0
  %v189 = vsel %vm97, %v57, 0
  %v192 = vsel %vm97, %v58, 0
  %v195 = vsel %vm97, %v59, 0
  %v198 = vsel %vm97, %v60, 0
  %v201 = vsel %vm97, %v61, 0
  %v204 = vsel %vm97, %v62, 0
  %v207 = vsel %vm97, %v63, 0
  %v210 = vsel %vm97, %v64, 0
  %v213 = vsel %vm97, %v65, 0
  %v216 = vsel %vm97, %v66, 0
  %v219 = vsel %vm97, %v67, 0
  %v222 = vsel %vm97, %v68, 0
  %v225 = vsel %vm97, %v69, 0
  %v228 = vsel %vm97, %v70, 0
  %v231 = vsel %vm97, %v71, 0
  %v234 = vsel %vm97, %v72, 0
  %v237 = vsel %vm97, %v73, 0
  %v240 = vsel %vm97, %v74, 0
  %v243 = vsel %vm97, %v75, 0
  %v246 = vsel %vm97, %v76, 0
  %v249 = vsel %vm97, %v77, 0
  %v252 = vsel %vm97, %v78, 0
  %v255 = vsel %vm97, %v79, 0
  %v258 = vsel %vm97, %v80, 0
  %v261 = vsel %vm97, %v81, 0
  %v264 = vsel %vm97, %v82, 0
  %v267 = vsel %vm97, %v83, 0
  %v270 = vsel %vm97, %v84, 0
  %v273 = vsel %vm97, %v85, 0
  %v276 = vsel %vm97, %v86, 0
  %v279 = vsel %vm97, %v87, 0
  %v282 = vsel %vm97, %v88, 0
  %v285 = vsel %vm97, %v89, 0
  %v288 = vsel %vm97, %v90, 0
  %290 = vmatpush.msra.mxu0 0.0
  %291 = vmatpush.msra.mxu0 0.0
  %292 = vmatpush.msra.mxu0 0.0
  %293 = vmatpush.msra.mxu0 0.0
  %294 = vmatpush.msra.mxu0 0.0
  %295 = vmatpush.msra.mxu0 0.0
  %296 = vmatpush.msra.mxu0 0.0
  %297 = vmatpush.msra.mxu0 0.0
  %298 = vmatpush.msra.mxu0 0.0
  %299 = vmatpush.msra.mxu0 0.0
  %300 = vmatpush.msra.mxu0 0.0
  %301 = vmatpush.msra.mxu0 0.0
  %302 = vmatpush.msra.mxu0 0.0
  %303 = vmatpush.msra.mxu0 0.0
  %304 = vmatpush.msra.mxu0 %v92
  %305 = vmatpush.msra.mxu0 %v91
  %306 = vmatmul.f32.gmra.mxu0 %v99
  %v307 = vpop.f32.mrf.mxu0
  %v308 = vadd.f32 %v95, %v307
  %309 = vmatmul.f32.gmra.mxu0 %v102
  %v310 = vpop.f32.mrf.mxu0
  %v311 = vadd.f32 %v95, %v310
  %312 = vmatmul.f32.gmra.mxu0 %v105
  %v313 = vpop.f32.mrf.mxu0
  %v314 = vadd.f32 %v95, %v313
  %315 = vmatmul.f32.gmra.mxu0 %v108
  %v316 = vpop.f32.mrf.mxu0
  %v317 = vadd.f32 %v95, %v316
  %318 = vmatmul.f32.gmra.mxu0 %v111
  %v319 = vpop.f32.mrf.mxu0
  %v320 = vadd.f32 %v95, %v319
  %321 = vmatmul.f32.gmra.mxu0 %v114
  %v322 = vpop.f32.mrf.mxu0
  %v323 = vadd.f32 %v95, %v322
  %324 = vmatmul.f32.gmra.mxu0 %v117
  %v325 = vpop.f32.mrf.mxu0
  %v326 = vadd.f32 %v95, %v325
  %327 = vmatmul.f32.gmra.mxu0 %v120
  %v328 = vpop.f32.mrf.mxu0
  %v329 = vadd.f32 %v95, %v328
  %330 = vmatmul.f32.gmra.mxu0 %v123
  %v331 = vpop.f32.mrf.mxu0
  %v332 = vadd.f32 %v95, %v331
  %333 = vmatmul.f32.gmra.mxu0 %v126
  %v334 = vpop.f32.mrf.mxu0
  %v335 = vadd.f32 %v95, %v334
  %336 = vmatmul.f32.gmra.mxu0 %v129
  %v337 = vpop.f32.mrf.mxu0
  %v338 = vadd.f32 %v95, %v337
  %339 = vmatmul.f32.gmra.mxu0 %v132
  %v340 = vpop.f32.mrf.mxu0
  %v341 = vadd.f32 %v95, %v340
  %342 = vmatmul.f32.gmra.mxu0 %v135
  %v343 = vpop.f32.mrf.mxu0
  %v344 = vadd.f32 %v95, %v343
  %345 = vmatmul.f32.gmra.mxu0 %v138
  %v346 = vpop.f32.mrf.mxu0
  %v347 = vadd.f32 %v95, %v346
  %348 = vmatmul.f32.gmra.mxu0 %v141
  %v349 = vpop.f32.mrf.mxu0
  %v350 = vadd.f32 %v95, %v349
  %351 = vmatmul.f32.gmra.mxu0 %v144
  %v352 = vpop.f32.mrf.mxu0
  %v353 = vadd.f32 %v95, %v352
  %354 = vmatmul.f32.gmra.mxu0 %v147
  %v355 = vpop.f32.mrf.mxu0
  %v356 = vadd.f32 %v95, %v355
  %357 = vmatmul.f32.gmra.mxu0 %v150
  %v358 = vpop.f32.mrf.mxu0
  %v359 = vadd.f32 %v95, %v358
  %360 = vmatmul.f32.gmra.mxu0 %v153
  %v361 = vpop.f32.mrf.mxu0
  %v362 = vadd.f32 %v95, %v361
  %363 = vmatmul.f32.gmra.mxu0 %v156
  %v364 = vpop.f32.mrf.mxu0
  %v365 = vadd.f32 %v95, %v364
  %366 = vmatmul.f32.gmra.mxu0 %v159
  %v367 = vpop.f32.mrf.mxu0
  %v368 = vadd.f32 %v95, %v367
  %369 = vmatmul.f32.gmra.mxu0 %v162
  %v370 = vpop.f32.mrf.mxu0
  %v371 = vadd.f32 %v95, %v370
  %372 = vmatmul.f32.gmra.mxu0 %v165
  %v373 = vpop.f32.mrf.mxu0
  %v374 = vadd.f32 %v95, %v373
  %375 = vmatmul.f32.gmra.mxu0 %v168
  %v376 = vpop.f32.mrf.mxu0
  %v377 = vadd.f32 %v95, %v376
  %378 = vmatmul.f32.gmra.mxu0 %v171
  %v379 = vpop.f32.mrf.mxu0
  %v380 = vadd.f32 %v95, %v379
  %381 = vmatmul.f32.gmra.mxu0 %v174
  %v382 = vpop.f32.mrf.mxu0
  %v383 = vadd.f32 %v95, %v382
  %384 = vmatmul.f32.gmra.mxu0 %v177
  %v385 = vpop.f32.mrf.mxu0
  %v386 = vadd.f32 %v95, %v385
  %387 = vmatmul.f32.gmra.mxu0 %v180
  %v388 = vpop.f32.mrf.mxu0
  %v389 = vadd.f32 %v95, %v388
  %390 = vmatmul.f32.gmra.mxu0 %v183
  %v391 = vpop.f32.mrf.mxu0
  %v392 = vadd.f32 %v95, %v391
  %393 = vmatmul.f32.gmra.mxu0 %v186
  %v394 = vpop.f32.mrf.mxu0
  %v395 = vadd.f32 %v95, %v394
  %396 = vmatmul.f32.gmra.mxu0 %v189
  %v397 = vpop.f32.mrf.mxu0
  %v398 = vadd.f32 %v95, %v397
  %399 = vmatmul.f32.gmra.mxu0 %v192
  %v400 = vpop.f32.mrf.mxu0
  %v401 = vadd.f32 %v95, %v400
  %402 = vmatmul.f32.gmra.mxu0 %v195
  %v403 = vpop.f32.mrf.mxu0
  %v404 = vadd.f32 %v95, %v403
  %405 = vmatmul.f32.gmra.mxu0 %v198
  %v406 = vpop.f32.mrf.mxu0
  %v407 = vadd.f32 %v95, %v406
  %408 = vmatmul.f32.gmra.mxu0 %v201
  %v409 = vpop.f32.mrf.mxu0
  %v410 = vadd.f32 %v95, %v409
  %411 = vmatmul.f32.gmra.mxu0 %v204
  %v412 = vpop.f32.mrf.mxu0
  %v413 = vadd.f32 %v95, %v412
  %414 = vmatmul.f32.gmra.mxu0 %v207
  %v415 = vpop.f32.mrf.mxu0
  %v416 = vadd.f32 %v95, %v415
  %417 = vmatmul.f32.gmra.mxu0 %v210
  %v418 = vpop.f32.mrf.mxu0
  %v419 = vadd.f32 %v95, %v418
  %420 = vmatmul.f32.gmra.mxu0 %v213
  %v421 = vpop.f32.mrf.mxu0
  %v422 = vadd.f32 %v95, %v421
  %423 = vmatmul.f32.gmra.mxu0 %v216
  %v424 = vpop.f32.mrf.mxu0
  %v425 = vadd.f32 %v95, %v424
  %426 = vmatmul.f32.gmra.mxu0 %v219
  %v427 = vpop.f32.mrf.mxu0
  %v428 = vadd.f32 %v95, %v427
  %429 = vmatmul.f32.gmra.mxu0 %v222
  %v430 = vpop.f32.mrf.mxu0
  %v431 = vadd.f32 %v95, %v430
  %432 = vmatmul.f32.gmra.mxu0 %v225
  %v433 = vpop.f32.mrf.mxu0
  %v434 = vadd.f32 %v95, %v433
  %435 = vmatmul.f32.gmra.mxu0 %v228
  %v436 = vpop.f32.mrf.mxu0
  %v437 = vadd.f32 %v95, %v436
  %438 = vmatmul.f32.gmra.mxu0 %v231
  %v439 = vpop.f32.mrf.mxu0
  %v440 = vadd.f32 %v95, %v439
  %441 = vmatmul.f32.gmra.mxu0 %v234
  %v442 = vpop.f32.mrf.mxu0
  %v443 = vadd.f32 %v95, %v442
  %444 = vmatmul.f32.gmra.mxu0 %v237
  %v445 = vpop.f32.mrf.mxu0
  %v446 = vadd.f32 %v95, %v445
  %447 = vmatmul.f32.gmra.mxu0 %v240
  %v448 = vpop.f32.mrf.mxu0
  %v449 = vadd.f32 %v95, %v448
  %450 = vmatmul.f32.gmra.mxu0 %v243
  %v451 = vpop.f32.mrf.mxu0
  %v452 = vadd.f32 %v95, %v451
  %453 = vmatmul.f32.gmra.mxu0 %v246
  %v454 = vpop.f32.mrf.mxu0
  %v455 = vadd.f32 %v95, %v454
  %456 = vmatmul.f32.gmra.mxu0 %v249
  %v457 = vpop.f32.mrf.mxu0
  %v458 = vadd.f32 %v95, %v457
  %459 = vmatmul.f32.gmra.mxu0 %v252
  %v460 = vpop.f32.mrf.mxu0
  %v461 = vadd.f32 %v95, %v460
  %462 = vmatmul.f32.gmra.mxu0 %v255
  %v463 = vpop.f32.mrf.mxu0
  %v464 = vadd.f32 %v95, %v463
  %465 = vmatmul.f32.gmra.mxu0 %v258
  %v466 = vpop.f32.mrf.mxu0
  %v467 = vadd.f32 %v95, %v466
  %468 = vmatmul.f32.gmra.mxu0 %v261
  %v469 = vpop.f32.mrf.mxu0
  %v470 = vadd.f32 %v95, %v469
  %471 = vmatmul.f32.gmra.mxu0 %v264
  %v472 = vpop.f32.mrf.mxu0
  %v473 = vadd.f32 %v95, %v472
  %474 = vmatmul.f32.gmra.mxu0 %v267
  %v475 = vpop.f32.mrf.mxu0
  %v476 = vadd.f32 %v95, %v475
  %477 = vmatmul.f32.gmra.mxu0 %v270
  %v478 = vpop.f32.mrf.mxu0
  %v479 = vadd.f32 %v95, %v478
  %480 = vmatmul.f32.gmra.mxu0 %v273
  %v481 = vpop.f32.mrf.mxu0
  %v482 = vadd.f32 %v95, %v481
  %483 = vmatmul.f32.gmra.mxu0 %v276
  %v484 = vpop.f32.mrf.mxu0
  %v485 = vadd.f32 %v95, %v484
  %486 = vmatmul.f32.gmra.mxu0 %v279
  %v487 = vpop.f32.mrf.mxu0
  %v488 = vadd.f32 %v95, %v487
  %489 = vmatmul.f32.gmra.mxu0 %v282
  %v490 = vpop.f32.mrf.mxu0
  %v491 = vadd.f32 %v95, %v490
  %492 = vmatmul.f32.gmra.mxu0 %v285
  %v493 = vpop.f32.mrf.mxu0
  %v494 = vadd.f32 %v95, %v493
  %495 = vmatmul.f32.gmra.mxu0 %v288
  %v496 = vpop.f32.mrf.mxu0
  %v497 = vadd.f32 %v95, %v496
  %498 = vdwg.mxu0
  %v499 = vmax.f32 %v308, 0.0
  %v500 = vmax.f32 %v311, 0.0
  %v501 = vmax.f32 %v314, 0.0
  %v502 = vmax.f32 %v317, 0.0
  %v503 = vmax.f32 %v320, 0.0
  %v504 = vmax.f32 %v323, 0.0
  %v505 = vmax.f32 %v326, 0.0
  %v506 = vmax.f32 %v329, 0.0
  %v507 = vmax.f32 %v332, 0.0
  %v508 = vmax.f32 %v335, 0.0
  %v509 = vmax.f32 %v338, 0.0
  %v510 = vmax.f32 %v341, 0.0
  %v511 = vmax.f32 %v344, 0.0
  %v512 = vmax.f32 %v347, 0.0
  %v513 = vmax.f32 %v350, 0.0
  %v514 = vmax.f32 %v353, 0.0
  %v515 = vmax.f32 %v356, 0.0
  %v516 = vmax.f32 %v359, 0.0
  %v517 = vmax.f32 %v362, 0.0
  %v518 = vmax.f32 %v365, 0.0
  %v519 = vmax.f32 %v368, 0.0
  %v520 = vmax.f32 %v371, 0.0
  %v521 = vmax.f32 %v374, 0.0
  %v522 = vmax.f32 %v377, 0.0
  %v523 = vmax.f32 %v380, 0.0
  %v524 = vmax.f32 %v383, 0.0
  %v525 = vmax.f32 %v386, 0.0
  %v526 = vmax.f32 %v389, 0.0
  %v527 = vmax.f32 %v392, 0.0
  %v528 = vmax.f32 %v395, 0.0
  %v529 = vmax.f32 %v398, 0.0
  %v530 = vmax.f32 %v401, 0.0
  %v531 = vmax.f32 %v404, 0.0
  %v532 = vmax.f32 %v407, 0.0
  %v533 = vmax.f32 %v410, 0.0
  %v534 = vmax.f32 %v413, 0.0
  %v535 = vmax.f32 %v416, 0.0
  %v536 = vmax.f32 %v419, 0.0
  %v537 = vmax.f32 %v422, 0.0
  %v538 = vmax.f32 %v425, 0.0
  %v539 = vmax.f32 %v428, 0.0
  %v540 = vmax.f32 %v431, 0.0
  %v541 = vmax.f32 %v434, 0.0
  %v542 = vmax.f32 %v437, 0.0
  %v543 = vmax.f32 %v440, 0.0
  %v544 = vmax.f32 %v443, 0.0
  %v545 = vmax.f32 %v446, 0.0
  %v546 = vmax.f32 %v449, 0.0
  %v547 = vmax.f32 %v452, 0.0
  %v548 = vmax.f32 %v455, 0.0
  %v549 = vmax.f32 %v458, 0.0
  %v550 = vmax.f32 %v461, 0.0
  %v551 = vmax.f32 %v464, 0.0
  %v552 = vmax.f32 %v467, 0.0
  %v553 = vmax.f32 %v470, 0.0
  %v554 = vmax.f32 %v473, 0.0
  %v555 = vmax.f32 %v476, 0.0
  %v556 = vmax.f32 %v479, 0.0
  %v557 = vmax.f32 %v482, 0.0
  %v558 = vmax.f32 %v485, 0.0
  %v559 = vmax.f32 %v488, 0.0
  %v560 = vmax.f32 %v491, 0.0
  %v561 = vmax.f32 %v494, 0.0
  %v562 = vmax.f32 %v497, 0.0
  %v563 = vld [vmem:[%s3] sm:$0xff]
  %v564 = vld [vmem:[%s3 + $0x8] sm:$0xff]
  %v565 = vld [vmem:[%s3 + $0x10] sm:$0xff]
  %v566 = vld [vmem:[%s3 + $0x18] sm:$0xff]
  %v567 = vld [vmem:[%s3 + $0x20] sm:$0xff]
  %v568 = vld [vmem:[%s3 + $0x28] sm:$0xff]
  %v569 = vld [vmem:[%s3 + $0x30] sm:$0xff]
  %v570 = vld [vmem:[%s3 + $0x38] sm:$0xff]
  %v571 = vld [vmem:[%s3 + $0x40] sm:$0xff]
  %v572 = vld [vmem:[%s3 + $0x48] sm:$0xff]
  %v573 = vld [vmem:[%s3 + $0x50] sm:$0xff]
  %v574 = vld [vmem:[%s3 + $0x58] sm:$0xff]
  %v575 = vld [vmem:[%s3 + $0x60] sm:$0xff]
  %v576 = vld [vmem:[%s3 + $0x68] sm:$0xff]
  %v577 = vld [vmem:[%s3 + $0x70] sm:$0xff]
  %v578 = vld [vmem:[%s3 + $0x78] sm:$0xff]
  %v579 = vld [vmem:[%s4] sm:$0x1]
  %v581 = vperm.slane %v579, 0
  %583 = vmatpush.msra.mxu0 %v578
  %584 = vmatpush.msra.mxu0 %v577
  %585 = vmatpush.msra.mxu0 %v576
  %586 = vmatpush.msra.mxu0 %v575
  %587 = vmatpush.msra.mxu0 %v574
  %588 = vmatpush.msra.mxu0 %v573
  %589 = vmatpush.msra.mxu0 %v572
  %590 = vmatpush.msra.mxu0 %v571
  %591 = vmatpush.msra.mxu0 %v570
  %592 = vmatpush.msra.mxu0 %v569
  %593 = vmatpush.msra.mxu0 %v568
  %594 = vmatpush.msra.mxu0 %v567
  %595 = vmatpush.msra.mxu0 %v566
  %596 = vmatpush.msra.mxu0 %v565
  %597 = vmatpush.msra.mxu0 %v564
  %598 = vmatpush.msra.mxu0 %v563
  %599 = vmatmul.f32.gmra.mxu0 %v499
  %v600 = vpop.f32.mrf.mxu0
  %v601 = vadd.f32 %v581, %v600
  %602 = vmatmul.f32.gmra.mxu0 %v500
  %v603 = vpop.f32.mrf.mxu0
  %v604 = vadd.f32 %v581, %v603
  %605 = vmatmul.f32.gmra.mxu0 %v501
  %v606 = vpop.f32.mrf.mxu0
  %v607 = vadd.f32 %v581, %v606
  %608 = vmatmul.f32.gmra.mxu0 %v502
  %v609 = vpop.f32.mrf.mxu0
  %v610 = vadd.f32 %v581, %v609
  %611 = vmatmul.f32.gmra.mxu0 %v503
  %v612 = vpop.f32.mrf.mxu0
  %v613 = vadd.f32 %v581, %v612
  %614 = vmatmul.f32.gmra.mxu0 %v504
  %v615 = vpop.f32.mrf.mxu0
  %v616 = vadd.f32 %v581, %v615
  %617 = vmatmul.f32.gmra.mxu0 %v505
  %v618 = vpop.f32.mrf.mxu0
  %v619 = vadd.f32 %v581, %v618
  %620 = vmatmul.f32.gmra.mxu0 %v506
  %v621 = vpop.f32.mrf.mxu0
  %v622 = vadd.f32 %v581, %v621
  %623 = vmatmul.f32.gmra.mxu0 %v507
  %v624 = vpop.f32.mrf.mxu0
  %v625 = vadd.f32 %v581, %v624
  %626 = vmatmul.f32.gmra.mxu0 %v508
  %v627 = vpop.f32.mrf.mxu0
  %v628 = vadd.f32 %v581, %v627
  %629 = vmatmul.f32.gmra.mxu0 %v509
  %v630 = vpop.f32.mrf.mxu0
  %v631 = vadd.f32 %v581, %v630
  %632 = vmatmul.f32.gmra.mxu0 %v510
  %v633 = vpop.f32.mrf.mxu0
  %v634 = vadd.f32 %v581, %v633
  %635 = vmatmul.f32.gmra.mxu0 %v511
  %v636 = vpop.f32.mrf.mxu0
  %v637 = vadd.f32 %v581, %v636
  %638 = vmatmul.f32.gmra.mxu0 %v512
  %v639 = vpop.f32.mrf.mxu0
  %v640 = vadd.f32 %v581, %v639
  %641 = vmatmul.f32.gmra.mxu0 %v513
  %v642 = vpop.f32.mrf.mxu0
  %v643 = vadd.f32 %v581, %v642
  %644 = vmatmul.f32.gmra.mxu0 %v514
  %v645 = vpop.f32.mrf.mxu0
  %v646 = vadd.f32 %v581, %v645
  %647 = vmatmul.f32.gmra.mxu0 %v515
  %v648 = vpop.f32.mrf.mxu0
  %v649 = vadd.f32 %v581, %v648
  %650 = vmatmul.f32.gmra.mxu0 %v516
  %v651 = vpop.f32.mrf.mxu0
  %v652 = vadd.f32 %v581, %v651
  %653 = vmatmul.f32.gmra.mxu0 %v517
  %v654 = vpop.f32.mrf.mxu0
  %v655 = vadd.f32 %v581, %v654
  %656 = vmatmul.f32.gmra.mxu0 %v518
  %v657 = vpop.f32.mrf.mxu0
  %v658 = vadd.f32 %v581, %v657
  %659 = vmatmul.f32.gmra.mxu0 %v519
  %v660 = vpop.f32.mrf.mxu0
  %v661 = vadd.f32 %v581, %v660
  %662 = vmatmul.f32.gmra.mxu0 %v520
  %v663 = vpop.f32.mrf.mxu0
  %v664 = vadd.f32 %v581, %v663
  %665 = vmatmul.f32.gmra.mxu0 %v521
  %v666 = vpop.f32.mrf.mxu0
  %v667 = vadd.f32 %v581, %v666
  %668 = vmatmul.f32.gmra.mxu0 %v522
  %v669 = vpop.f32.mrf.mxu0
  %v670 = vadd.f32 %v581, %v669
  %671 = vmatmul.f32.gmra.mxu0 %v523
  %v672 = vpop.f32.mrf.mxu0
  %v673 = vadd.f32 %v581, %v672
  %674 = vmatmul.f32.gmra.mxu0 %v524
  %v675 = vpop.f32.mrf.mxu0
  %v676 = vadd.f32 %v581, %v675
  %677 = vmatmul.f32.gmra.mxu0 %v525
  %v678 = vpop.f32.mrf.mxu0
  %v679 = vadd.f32 %v581, %v678
  %680 = vmatmul.f32.gmra.mxu0 %v526
  %v681 = vpop.f32.mrf.mxu0
  %v682 = vadd.f32 %v581, %v681
  %683 = vmatmul.f32.gmra.mxu0 %v527
  %v684 = vpop.f32.mrf.mxu0
  %v685 = vadd.f32 %v581, %v684
  %686 = vmatmul.f32.gmra.mxu0 %v528
  %v687 = vpop.f32.mrf.mxu0
  %v688 = vadd.f32 %v581, %v687
  %689 = vmatmul.f32.gmra.mxu0 %v529
  %v690 = vpop.f32.mrf.mxu0
  %v691 = vadd.f32 %v581, %v690
  %692 = vmatmul.f32.gmra.mxu0 %v530
  %v693 = vpop.f32.mrf.mxu0
  %v694 = vadd.f32 %v581, %v693
  %695 = vmatmul.f32.gmra.mxu0 %v531
  %v696 = vpop.f32.mrf.mxu0
  %v697 = vadd.f32 %v581, %v696
  %698 = vmatmul.f32.gmra.mxu0 %v532
  %v699 = vpop.f32.mrf.mxu0
  %v700 = vadd.f32 %v581, %v699
  %701 = vmatmul.f32.gmra.mxu0 %v533
  %v702 = vpop.f32.mrf.mxu0
  %v703 = vadd.f32 %v581, %v702
  %704 = vmatmul.f32.gmra.mxu0 %v534
  %v705 = vpop.f32.mrf.mxu0
  %v706 = vadd.f32 %v581, %v705
  %707 = vmatmul.f32.gmra.mxu0 %v535
  %v708 = vpop.f32.mrf.mxu0
  %v709 = vadd.f32 %v581, %v708
  %710 = vmatmul.f32.gmra.mxu0 %v536
  %v711 = vpop.f32.mrf.mxu0
  %v712 = vadd.f32 %v581, %v711
  %713 = vmatmul.f32.gmra.mxu0 %v537
  %v714 = vpop.f32.mrf.mxu0
  %v715 = vadd.f32 %v581, %v714
  %716 = vmatmul.f32.gmra.mxu0 %v538
  %v717 = vpop.f32.mrf.mxu0
  %v718 = vadd.f32 %v581, %v717
  %719 = vmatmul.f32.gmra.mxu0 %v539
  %v720 = vpop.f32.mrf.mxu0
  %v721 = vadd.f32 %v581, %v720
  %722 = vmatmul.f32.gmra.mxu0 %v540
  %v723 = vpop.f32.mrf.mxu0
  %v724 = vadd.f32 %v581, %v723
  %725 = vmatmul.f32.gmra.mxu0 %v541
  %v726 = vpop.f32.mrf.mxu0
  %v727 = vadd.f32 %v581, %v726
  %728 = vmatmul.f32.gmra.mxu0 %v542
  %v729 = vpop.f32.mrf.mxu0
  %v730 = vadd.f32 %v581, %v729
  %731 = vmatmul.f32.gmra.mxu0 %v543
  %v732 = vpop.f32.mrf.mxu0
  %v733 = vadd.f32 %v581, %v732
  %734 = vmatmul.f32.gmra.mxu0 %v544
  %v735 = vpop.f32.mrf.mxu0
  %v736 = vadd.f32 %v581, %v735
  %737 = vmatmul.f32.gmra.mxu0 %v545
  %v738 = vpop.f32.mrf.mxu0
  %v739 = vadd.f32 %v581, %v738
  %740 = vmatmul.f32.gmra.mxu0 %v546
  %v741 = vpop.f32.mrf.mxu0
  %v742 = vadd.f32 %v581, %v741
  %743 = vmatmul.f32.gmra.mxu0 %v547
  %v744 = vpop.f32.mrf.mxu0
  %v745 = vadd.f32 %v581, %v744
  %746 = vmatmul.f32.gmra.mxu0 %v548
  %v747 = vpop.f32.mrf.mxu0
  %v748 = vadd.f32 %v581, %v747
  %749 = vmatmul.f32.gmra.mxu0 %v549
  %v750 = vpop.f32.mrf.mxu0
  %v751 = vadd.f32 %v581, %v750
  %752 = vmatmul.f32.gmra.mxu0 %v550
  %v753 = vpop.f32.mrf.mxu0
  %v754 = vadd.f32 %v581, %v753
  %755 = vmatmul.f32.gmra.mxu0 %v551
  %v756 = vpop.f32.mrf.mxu0
  %v757 = vadd.f32 %v581, %v756
  %758 = vmatmul.f32.gmra.mxu0 %v552
  %v759 = vpop.f32.mrf.mxu0
  %v760 = vadd.f32 %v581, %v759
  %761 = vmatmul.f32.gmra.mxu0 %v553
  %v762 = vpop.f32.mrf.mxu0
  %v763 = vadd.f32 %v581, %v762
  %764 = vmatmul.f32.gmra.mxu0 %v554
  %v765 = vpop.f32.mrf.mxu0
  %v766 = vadd.f32 %v581, %v765
  %767 = vmatmul.f32.gmra.mxu0 %v555
  %v768 = vpop.f32.mrf.mxu0
  %v769 = vadd.f32 %v581, %v768
  %770 = vmatmul.f32.gmra.mxu0 %v556
  %v771 = vpop.f32.mrf.mxu0
  %v772 = vadd.f32 %v581, %v771
  %773 = vmatmul.f32.gmra.mxu0 %v557
  %v774 = vpop.f32.mrf.mxu0
  %v775 = vadd.f32 %v581, %v774
  %776 = vmatmul.f32.gmra.mxu0 %v558
  %v777 = vpop.f32.mrf.mxu0
  %v778 = vadd.f32 %v581, %v777
  %779 = vmatmul.f32.gmra.mxu0 %v559
  %v780 = vpop.f32.mrf.mxu0
  %v781 = vadd.f32 %v581, %v780
  %782 = vmatmul.f32.gmra.mxu0 %v560
  %v783 = vpop.f32.mrf.mxu0
  %v784 = vadd.f32 %v581, %v783
  %785 = vmatmul.f32.gmra.mxu0 %v561
  %v786 = vpop.f32.mrf.mxu0
  %v787 = vadd.f32 %v581, %v786
  %788 = vmatmul.f32.gmra.mxu0 %v562
  %v789 = vpop.f32.mrf.mxu0
  %v790 = vadd.f32 %v581, %v789
  %791 = vdwg.mxu0
  %v792 = vmax.f32 %v601, 0.0
  %v793 = vmax.f32 %v604, 0.0
  %v794 = vmax.f32 %v607, 0.0
  %v795 = vmax.f32 %v610, 0.0
  %v796 = vmax.f32 %v613, 0.0
  %v797 = vmax.f32 %v616, 0.0
  %v798 = vmax.f32 %v619, 0.0
  %v799 = vmax.f32 %v622, 0.0
  %v800 = vmax.f32 %v625, 0.0
  %v801 = vmax.f32 %v628, 0.0
  %v802 = vmax.f32 %v631, 0.0
  %v803 = vmax.f32 %v634, 0.0
  %v804 = vmax.f32 %v637, 0.0
  %v805 = vmax.f32 %v640, 0.0
  %v806 = vmax.f32 %v643, 0.0
  %v807 = vmax.f32 %v646, 0.0
  %v808 = vmax.f32 %v649, 0.0
  %v809 = vmax.f32 %v652, 0.0
  %v810 = vmax.f32 %v655, 0.0
  %v811 = vmax.f32 %v658, 0.0
  %v812 = vmax.f32 %v661, 0.0
  %v813 = vmax.f32 %v664, 0.0
  %v814 = vmax.f32 %v667, 0.0
  %v815 = vmax.f32 %v670, 0.0
  %v816 = vmax.f32 %v673, 0.0
  %v817 = vmax.f32 %v676, 0.0
  %v818 = vmax.f32 %v679, 0.0
  %v819 = vmax.f32 %v682, 0.0
  %v820 = vmax.f32 %v685, 0.0
  %v821 = vmax.f32 %v688, 0.0
  %v822 = vmax.f32 %v691, 0.0
  %v823 = vmax.f32 %v694, 0.0
  %v824 = vmax.f32 %v697, 0.0
  %v825 = vmax.f32 %v700, 0.0
  %v826 = vmax.f32 %v703, 0.0
  %v827 = vmax.f32 %v706, 0.0
  %v828 = vmax.f32 %v709, 0.0
  %v829 = vmax.f32 %v712, 0.0
  %v830 = vmax.f32 %v715, 0.0
  %v831 = vmax.f32 %v718, 0.0
  %v832 = vmax.f32 %v721, 0.0
  %v833 = vmax.f32 %v724, 0.0
  %v834 = vmax.f32 %v727, 0.0
  %v835 = vmax.f32 %v730, 0.0
  %v836 = vmax.f32 %v733, 0.0
  %v837 = vmax.f32 %v736, 0.0
  %v838 = vmax.f32 %v739, 0.0
  %v839 = vmax.f32 %v742, 0.0
  %v840 = vmax.f32 %v745, 0.0
  %v841 = vmax.f32 %v748, 0.0
  %v842 = vmax.f32 %v751, 0.0
  %v843 = vmax.f32 %v754, 0.0
  %v844 = vmax.f32 %v757, 0.0
  %v845 = vmax.f32 %v760, 0.0
  %v846 = vmax.f32 %v763, 0.0
  %v847 = vmax.f32 %v766, 0.0
  %v848 = vmax.f32 %v769, 0.0
  %v849 = vmax.f32 %v772, 0.0
  %v850 = vmax.f32 %v775, 0.0
  %v851 = vmax.f32 %v778, 0.0
  %v852 = vmax.f32 %v781, 0.0
  %v853 = vmax.f32 %v784, 0.0
  %v854 = vmax.f32 %v787, 0.0
  %v855 = vmax.f32 %v790, 0.0
  %v856 = vld [vmem:[%s5] sm:$0xff]
  %v857 = vld [vmem:[%s5 + $0x8] sm:$0xff]
  %v858 = vld [vmem:[%s5 + $0x10] sm:$0xff]
  %v859 = vld [vmem:[%s5 + $0x18] sm:$0xff]
  %v860 = vld [vmem:[%s5 + $0x20] sm:$0xff]
  %v861 = vld [vmem:[%s5 + $0x28] sm:$0xff]
  %v862 = vld [vmem:[%s5 + $0x30] sm:$0xff]
  %v863 = vld [vmem:[%s5 + $0x38] sm:$0xff]
  %v864 = vld [vmem:[%s5 + $0x40] sm:$0xff]
  %v865 = vld [vmem:[%s5 + $0x48] sm:$0xff]
  %v866 = vld [vmem:[%s5 + $0x50] sm:$0xff]
  %v867 = vld [vmem:[%s5 + $0x58] sm:$0xff]
  %v868 = vld [vmem:[%s5 + $0x60] sm:$0xff]
  %v869 = vld [vmem:[%s5 + $0x68] sm:$0xff]
  %v870 = vld [vmem:[%s5 + $0x70] sm:$0xff]
  %v871 = vld [vmem:[%s5 + $0x78] sm:$0xff]
  %s872 = sld [smem:[#allocation2]]
  %v873 = vstv %s872
  %874 = vmatpush.msra.mxu0 %v871
  %875 = vmatpush.msra.mxu0 %v870
  %876 = vmatpush.msra.mxu0 %v869
  %877 = vmatpush.msra.mxu0 %v868
  %878 = vmatpush.msra.mxu0 %v867
  %879 = vmatpush.msra.mxu0 %v866
  %880 = vmatpush.msra.mxu0 %v865
  %881 = vmatpush.msra.mxu0 %v864
  %882 = vmatpush.msra.mxu0 %v863
  %883 = vmatpush.msra.mxu0 %v862
  %884 = vmatpush.msra.mxu0 %v861
  %885 = vmatpush.msra.mxu0 %v860
  %886 = vmatpush.msra.mxu0 %v859
  %887 = vmatpush.msra.mxu0 %v858
  %888 = vmatpush.msra.mxu0 %v857
  %889 = vmatpush.msra.mxu0 %v856
  %890 = vmatmul.f32.gmra.mxu0 %v792
  %v891 = vpop.f32.mrf.mxu0
  %v892 = vadd.f32 %v873, %v891
  %893 = vmatmul.f32.gmra.mxu0 %v793
  %v894 = vpop.f32.mrf.mxu0
  %v895 = vadd.f32 %v873, %v894
  %896 = vmatmul.f32.gmra.mxu0 %v794
  %v897 = vpop.f32.mrf.mxu0
  %v898 = vadd.f32 %v873, %v897
  %899 = vmatmul.f32.gmra.mxu0 %v795
  %v900 = vpop.f32.mrf.mxu0
  %v901 = vadd.f32 %v873, %v900
  %902 = vmatmul.f32.gmra.mxu0 %v796
  %v903 = vpop.f32.mrf.mxu0
  %v904 = vadd.f32 %v873, %v903
  %905 = vmatmul.f32.gmra.mxu0 %v797
  %v906 = vpop.f32.mrf.mxu0
  %v907 = vadd.f32 %v873, %v906
  %908 = vmatmul.f32.gmra.mxu0 %v798
  %v909 = vpop.f32.mrf.mxu0
  %v910 = vadd.f32 %v873, %v909
  %911 = vmatmul.f32.gmra.mxu0 %v799
  %v912 = vpop.f32.mrf.mxu0
  %v913 = vadd.f32 %v873, %v912
  %914 = vmatmul.f32.gmra.mxu0 %v800
  %v915 = vpop.f32.mrf.mxu0
  %v916 = vadd.f32 %v873, %v915
  %917 = vmatmul.f32.gmra.mxu0 %v801
  %v918 = vpop.f32.mrf.mxu0
  %v919 = vadd.f32 %v873, %v918
  %920 = vmatmul.f32.gmra.mxu0 %v802
  %v921 = vpop.f32.mrf.mxu0
  %v922 = vadd.f32 %v873, %v921
  %923 = vmatmul.f32.gmra.mxu0 %v803
  %v924 = vpop.f32.mrf.mxu0
  %v925 = vadd.f32 %v873, %v924
  %926 = vmatmul.f32.gmra.mxu0 %v804
  %v927 = vpop.f32.mrf.mxu0
  %v928 = vadd.f32 %v873, %v927
  %929 = vmatmul.f32.gmra.mxu0 %v805
  %v930 = vpop.f32.mrf.mxu0
  %v931 = vadd.f32 %v873, %v930
  %932 = vmatmul.f32.gmra.mxu0 %v806
  %v933 = vpop.f32.mrf.mxu0
  %v934 = vadd.f32 %v873, %v933
  %935 = vmatmul.f32.gmra.mxu0 %v807
  %v936 = vpop.f32.mrf.mxu0
  %v937 = vadd.f32 %v873, %v936
  %938 = vmatmul.f32.gmra.mxu0 %v808
  %v939 = vpop.f32.mrf.mxu0
  %v940 = vadd.f32 %v873, %v939
  %941 = vmatmul.f32.gmra.mxu0 %v809
  %v942 = vpop.f32.mrf.mxu0
  %v943 = vadd.f32 %v873, %v942
  %944 = vmatmul.f32.gmra.mxu0 %v810
  %v945 = vpop.f32.mrf.mxu0
  %v946 = vadd.f32 %v873, %v945
  %947 = vmatmul.f32.gmra.mxu0 %v811
  %v948 = vpop.f32.mrf.mxu0
  %v949 = vadd.f32 %v873, %v948
  %950 = vmatmul.f32.gmra.mxu0 %v812
  %v951 = vpop.f32.mrf.mxu0
  %v952 = vadd.f32 %v873, %v951
  %953 = vmatmul.f32.gmra.mxu0 %v813
  %v954 = vpop.f32.mrf.mxu0
  %v955 = vadd.f32 %v873, %v954
  %956 = vmatmul.f32.gmra.mxu0 %v814
  %v957 = vpop.f32.mrf.mxu0
  %v958 = vadd.f32 %v873, %v957
  %959 = vmatmul.f32.gmra.mxu0 %v815
  %v960 = vpop.f32.mrf.mxu0
  %v961 = vadd.f32 %v873, %v960
  %962 = vmatmul.f32.gmra.mxu0 %v816
  %v963 = vpop.f32.mrf.mxu0
  %v964 = vadd.f32 %v873, %v963
  %965 = vmatmul.f32.gmra.mxu0 %v817
  %v966 = vpop.f32.mrf.mxu0
  %v967 = vadd.f32 %v873, %v966
  %968 = vmatmul.f32.gmra.mxu0 %v818
  %v969 = vpop.f32.mrf.mxu0
  %v970 = vadd.f32 %v873, %v969
  %971 = vmatmul.f32.gmra.mxu0 %v819
  %v972 = vpop.f32.mrf.mxu0
  %v973 = vadd.f32 %v873, %v972
  %974 = vmatmul.f32.gmra.mxu0 %v820
  %v975 = vpop.f32.mrf.mxu0
  %v976 = vadd.f32 %v873, %v975
  %977 = vmatmul.f32.gmra.mxu0 %v821
  %v978 = vpop.f32.mrf.mxu0
  %v979 = vadd.f32 %v873, %v978
  %980 = vmatmul.f32.gmra.mxu0 %v822
  %v981 = vpop.f32.mrf.mxu0
  %v982 = vadd.f32 %v873, %v981
  %983 = vmatmul.f32.gmra.mxu0 %v823
  %v984 = vpop.f32.mrf.mxu0
  %v985 = vadd.f32 %v873, %v984
  %986 = vmatmul.f32.gmra.mxu0 %v824
  %v987 = vpop.f32.mrf.mxu0
  %v988 = vadd.f32 %v873, %v987
  %989 = vmatmul.f32.gmra.mxu0 %v825
  %v990 = vpop.f32.mrf.mxu0
  %v991 = vadd.f32 %v873, %v990
  %992 = vmatmul.f32.gmra.mxu0 %v826
  %v993 = vpop.f32.mrf.mxu0
  %v994 = vadd.f32 %v873, %v993
  %995 = vmatmul.f32.gmra.mxu0 %v827
  %v996 = vpop.f32.mrf.mxu0
  %v997 = vadd.f32 %v873, %v996
  %998 = vmatmul.f32.gmra.mxu0 %v828
  %v999 = vpop.f32.mrf.mxu0
  %v1000 = vadd.f32 %v873, %v999
  %1001 = vmatmul.f32.gmra.mxu0 %v829
  %v1002 = vpop.f32.mrf.mxu0
  %v1003 = vadd.f32 %v873, %v1002
  %1004 = vmatmul.f32.gmra.mxu0 %v830
  %v1005 = vpop.f32.mrf.mxu0
  %v1006 = vadd.f32 %v873, %v1005
  %1007 = vmatmul.f32.gmra.mxu0 %v831
  %v1008 = vpop.f32.mrf.mxu0
  %v1009 = vadd.f32 %v873, %v1008
  %1010 = vmatmul.f32.gmra.mxu0 %v832
  %v1011 = vpop.f32.mrf.mxu0
  %v1012 = vadd.f32 %v873, %v1011
  %1013 = vmatmul.f32.gmra.mxu0 %v833
  %v1014 = vpop.f32.mrf.mxu0
  %v1015 = vadd.f32 %v873, %v1014
  %1016 = vmatmul.f32.gmra.mxu0 %v834
  %v1017 = vpop.f32.mrf.mxu0
  %v1018 = vadd.f32 %v873, %v1017
  %1019 = vmatmul.f32.gmra.mxu0 %v835
  %v1020 = vpop.f32.mrf.mxu0
  %v1021 = vadd.f32 %v873, %v1020
  %1022 = vmatmul.f32.gmra.mxu0 %v836
  %v1023 = vpop.f32.mrf.mxu0
  %v1024 = vadd.f32 %v873, %v1023
  %1025 = vmatmul.f32.gmra.mxu0 %v837
  %v1026 = vpop.f32.mrf.mxu0
  %v1027 = vadd.f32 %v873, %v1026
  %1028 = vmatmul.f32.gmra.mxu0 %v838
  %v1029 = vpop.f32.mrf.mxu0
  %v1030 = vadd.f32 %v873, %v1029
  %1031 = vmatmul.f32.gmra.mxu0 %v839
  %v1032 = vpop.f32.mrf.mxu0
  %v1033 = vadd.f32 %v873, %v1032
  %1034 = vmatmul.f32.gmra.mxu0 %v840
  %v1035 = vpop.f32.mrf.mxu0
  %v1036 = vadd.f32 %v873, %v1035
  %1037 = vmatmul.f32.gmra.mxu0 %v841
  %v1038 = vpop.f32.mrf.mxu0
  %v1039 = vadd.f32 %v873, %v1038
  %1040 = vmatmul.f32.gmra.mxu0 %v842
  %v1041 = vpop.f32.mrf.mxu0
  %v1042 = vadd.f32 %v873, %v1041
  %1043 = vmatmul.f32.gmra.mxu0 %v843
  %v1044 = vpop.f32.mrf.mxu0
  %v1045 = vadd.f32 %v873, %v1044
  %1046 = vmatmul.f32.gmra.mxu0 %v844
  %v1047 = vpop.f32.mrf.mxu0
  %v1048 = vadd.f32 %v873, %v1047
  %1049 = vmatmul.f32.gmra.mxu0 %v845
  %v1050 = vpop.f32.mrf.mxu0
  %v1051 = vadd.f32 %v873, %v1050
  %1052 = vmatmul.f32.gmra.mxu0 %v846
  %v1053 = vpop.f32.mrf.mxu0
  %v1054 = vadd.f32 %v873, %v1053
  %1055 = vmatmul.f32.gmra.mxu0 %v847
  %v1056 = vpop.f32.mrf.mxu0
  %v1057 = vadd.f32 %v873, %v1056
  %1058 = vmatmul.f32.gmra.mxu0 %v848
  %v1059 = vpop.f32.mrf.mxu0
  %v1060 = vadd.f32 %v873, %v1059
  %1061 = vmatmul.f32.gmra.mxu0 %v849
  %v1062 = vpop.f32.mrf.mxu0
  %v1063 = vadd.f32 %v873, %v1062
  %1064 = vmatmul.f32.gmra.mxu0 %v850
  %v1065 = vpop.f32.mrf.mxu0
  %v1066 = vadd.f32 %v873, %v1065
  %1067 = vmatmul.f32.gmra.mxu0 %v851
  %v1068 = vpop.f32.mrf.mxu0
  %v1069 = vadd.f32 %v873, %v1068
  %1070 = vmatmul.f32.gmra.mxu0 %v852
  %v1071 = vpop.f32.mrf.mxu0
  %v1072 = vadd.f32 %v873, %v1071
  %1073 = vmatmul.f32.gmra.mxu0 %v853
  %v1074 = vpop.f32.mrf.mxu0
  %v1075 = vadd.f32 %v873, %v1074
  %1076 = vmatmul.f32.gmra.mxu0 %v854
  %v1077 = vpop.f32.mrf.mxu0
  %v1078 = vadd.f32 %v873, %v1077
  %1079 = vmatmul.f32.gmra.mxu0 %v855
  %v1080 = vpop.f32.mrf.mxu0
  %v1081 = vadd.f32 %v873, %v1080
  %1082 = vdwg.mxu0
  %v1083 = vxor.u32 %v892, 2147483648
  %v1084 = vxor.u32 %v895, 2147483648
  %v1085 = vxor.u32 %v898, 2147483648
  %v1086 = vxor.u32 %v901, 2147483648
  %v1087 = vxor.u32 %v904, 2147483648
  %v1088 = vxor.u32 %v907, 2147483648
  %v1089 = vxor.u32 %v910, 2147483648
  %v1090 = vxor.u32 %v913, 2147483648
  %v1091 = vxor.u32 %v916, 2147483648
  %v1092 = vxor.u32 %v919, 2147483648
  %v1093 = vxor.u32 %v922, 2147483648
  %v1094 = vxor.u32 %v925, 2147483648
  %v1095 = vxor.u32 %v928, 2147483648
  %v1096 = vxor.u32 %v931, 2147483648
  %v1097 = vxor.u32 %v934, 2147483648
  %v1098 = vxor.u32 %v937, 2147483648
  %v1099 = vxor.u32 %v940, 2147483648
  %v1100 = vxor.u32 %v943, 2147483648
  %v1101 = vxor.u32 %v946, 2147483648
  %v1102 = vxor.u32 %v949, 2147483648
  %v1103 = vxor.u32 %v952, 2147483648
  %v1104 = vxor.u32 %v955, 2147483648
  %v1105 = vxor.u32 %v958, 2147483648
  %v1106 = vxor.u32 %v961, 2147483648
  %v1107 = vxor.u32 %v964, 2147483648
  %v1108 = vxor.u32 %v967, 2147483648
  %v1109 = vxor.u32 %v970, 2147483648
  %v1110 = vxor.u32 %v973, 2147483648
  %v1111 = vxor.u32 %v976, 2147483648
  %v1112 = vxor.u32 %v979, 2147483648
  %v1113 = vxor.u32 %v982, 2147483648
  %v1114 = vxor.u32 %v985, 2147483648
  %v1115 = vxor.u32 %v988, 2147483648
  %v1116 = vxor.u32 %v991, 2147483648
  %v1117 = vxor.u32 %v994, 2147483648
  %v1118 = vxor.u32 %v997, 2147483648
  %v1119 = vxor.u32 %v1000, 2147483648
  %v1120 = vxor.u32 %v1003, 2147483648
  %v1121 = vxor.u32 %v1006, 2147483648
  %v1122 = vxor.u32 %v1009, 2147483648
  %v1123 = vxor.u32 %v1012, 2147483648
  %v1124 = vxor.u32 %v1015, 2147483648
  %v1125 = vxor.u32 %v1018, 2147483648
  %v1126 = vxor.u32 %v1021, 2147483648
  %v1127 = vxor.u32 %v1024, 2147483648
  %v1128 = vxor.u32 %v1027, 2147483648
  %v1129 = vxor.u32 %v1030, 2147483648
  %v1130 = vxor.u32 %v1033, 2147483648
  %v1131 = vxor.u32 %v1036, 2147483648
  %v1132 = vxor.u32 %v1039, 2147483648
  %v1133 = vxor.u32 %v1042, 2147483648
  %v1134 = vxor.u32 %v1045, 2147483648
  %v1135 = vxor.u32 %v1048, 2147483648
  %v1136 = vxor.u32 %v1051, 2147483648
  %v1137 = vxor.u32 %v1054, 2147483648
  %v1138 = vxor.u32 %v1057, 2147483648
  %v1139 = vxor.u32 %v1060, 2147483648
  %v1140 = vxor.u32 %v1063, 2147483648
  %v1141 = vxor.u32 %v1066, 2147483648
  %v1142 = vxor.u32 %v1069, 2147483648
  %v1143 = vxor.u32 %v1072, 2147483648
  %v1144 = vxor.u32 %v1075, 2147483648
  %v1145 = vxor.u32 %v1078, 2147483648
  %v1146 = vxor.u32 %v1081, 2147483648
  %v1147 = vmul.f32 %v1083, 1.442695
  %v1148 = vpow.pop %v1147
  %v1149 = vmul.f32 %v1084, 1.442695
  %v1150 = vpow.pop %v1149
  %v1151 = vmul.f32 %v1085, 1.442695
  %v1152 = vpow.pop %v1151
  %v1153 = vmul.f32 %v1086, 1.442695
  %v1154 = vpow.pop %v1153
  %v1155 = vmul.f32 %v1087, 1.442695
  %v1156 = vpow.pop %v1155
  %v1157 = vmul.f32 %v1088, 1.442695
  %v1158 = vpow.pop %v1157
  %v1159 = vmul.f32 %v1089, 1.442695
  %v1160 = vpow.pop %v1159
  %v1161 = vmul.f32 %v1090, 1.442695
  %v1162 = vpow.pop %v1161
  %v1163 = vmul.f32 %v1091, 1.442695
  %v1164 = vpow.pop %v1163
  %v1165 = vmul.f32 %v1092, 1.442695
  %v1166 = vpow.pop %v1165
  %v1167 = vmul.f32 %v1093, 1.442695
  %v1168 = vpow.pop %v1167
  %v1169 = vmul.f32 %v1094, 1.442695
  %v1170 = vpow.pop %v1169
  %v1171 = vmul.f32 %v1095, 1.442695
  %v1172 = vpow.pop %v1171
  %v1173 = vmul.f32 %v1096, 1.442695
  %v1174 = vpow.pop %v1173
  %v1175 = vmul.f32 %v1097, 1.442695
  %v1176 = vpow.pop %v1175
  %v1177 = vmul.f32 %v1098, 1.442695
  %v1178 = vpow.pop %v1177
  %v1179 = vmul.f32 %v1099, 1.442695
  %v1180 = vpow.pop %v1179
  %v1181 = vmul.f32 %v1100, 1.442695
  %v1182 = vpow.pop %v1181
  %v1183 = vmul.f32 %v1101, 1.442695
  %v1184 = vpow.pop %v1183
  %v1185 = vmul.f32 %v1102, 1.442695
  %v1186 = vpow.pop %v1185
  %v1187 = vmul.f32 %v1103, 1.442695
  %v1188 = vpow.pop %v1187
  %v1189 = vmul.f32 %v1104, 1.442695
  %v1190 = vpow.pop %v1189
  %v1191 = vmul.f32 %v1105, 1.442695
  %v1192 = vpow.pop %v1191
  %v1193 = vmul.f32 %v1106, 1.442695
  %v1194 = vpow.pop %v1193
  %v1195 = vmul.f32 %v1107, 1.442695
  %v1196 = vpow.pop %v1195
  %v1197 = vmul.f32 %v1108, 1.442695
  %v1198 = vpow.pop %v1197
  %v1199 = vmul.f32 %v1109, 1.442695
  %v1200 = vpow.pop %v1199
  %v1201 = vmul.f32 %v1110, 1.442695
  %v1202 = vpow.pop %v1201
  %v1203 = vmul.f32 %v1111, 1.442695
  %v1204 = vpow.pop %v1203
  %v1205 = vmul.f32 %v1112, 1.442695
  %v1206 = vpow.pop %v1205
  %v1207 = vmul.f32 %v1113, 1.442695
  %v1208 = vpow.pop %v1207
  %v1209 = vmul.f32 %v1114, 1.442695
  %v1210 = vpow.pop %v1209
  %v1211 = vmul.f32 %v1115, 1.442695
  %v1212 = vpow.pop %v1211
  %v1213 = vmul.f32 %v1116, 1.442695
  %v1214 = vpow.pop %v1213
  %v1215 = vmul.f32 %v1117, 1.442695
  %v1216 = vpow.pop %v1215
  %v1217 = vmul.f32 %v1118, 1.442695
  %v1218 = vpow.pop %v1217
  %v1219 = vmul.f32 %v1119, 1.442695
  %v1220 = vpow.pop %v1219
  %v1221 = vmul.f32 %v1120, 1.442695
  %v1222 = vpow.pop %v1221
  %v1223 = vmul.f32 %v1121, 1.442695
  %v1224 = vpow.pop %v1223
  %v1225 = vmul.f32 %v1122, 1.442695
  %v1226 = vpow.pop %v1225
  %v1227 = vmul.f32 %v1123, 1.442695
  %v1228 = vpow.pop %v1227
  %v1229 = vmul.f32 %v1124, 1.442695
  %v1230 = vpow.pop %v1229
  %v1231 = vmul.f32 %v1125, 1.442695
  %v1232 = vpow.pop %v1231
  %v1233 = vmul.f32 %v1126, 1.442695
  %v1234 = vpow.pop %v1233
  %v1235 = vmul.f32 %v1127, 1.442695
  %v1236 = vpow.pop %v1235
  %v1237 = vmul.f32 %v1128, 1.442695
  %v1238 = vpow.pop %v1237
  %v1239 = vmul.f32 %v1129, 1.442695
  %v1240 = vpow.pop %v1239
  %v1241 = vmul.f32 %v1130, 1.442695
  %v1242 = vpow.pop %v1241
  %v1243 = vmul.f32 %v1131, 1.442695
  %v1244 = vpow.pop %v1243
  %v1245 = vmul.f32 %v1132, 1.442695
  %v1246 = vpow.pop %v1245
  %v1247 = vmul.f32 %v1133, 1.442695
  %v1248 = vpow.pop %v1247
  %v1249 = vmul.f32 %v1134, 1.442695
  %v1250 = vpow.pop %v1249
  %v1251 = vmul.f32 %v1135, 1.442695
  %v1252 = vpow.pop %v1251
  %v1253 = vmul.f32 %v1136, 1.442695
  %v1254 = vpow.pop %v1253
  %v1255 = vmul.f32 %v1137, 1.442695
  %v1256 = vpow.pop %v1255
  %v1257 = vmul.f32 %v1138, 1.442695
  %v1258 = vpow.pop %v1257
  %v1259 = vmul.f32 %v1139, 1.442695
  %v1260 = vpow.pop %v1259
  %v1261 = vmul.f32 %v1140, 1.442695
  %v1262 = vpow.pop %v1261
  %v1263 = vmul.f32 %v1141, 1.442695
  %v1264 = vpow.pop %v1263
  %v1265 = vmul.f32 %v1142, 1.442695
  %v1266 = vpow.pop %v1265
  %v1267 = vmul.f32 %v1143, 1.442695
  %v1268 = vpow.pop %v1267
  %v1269 = vmul.f32 %v1144, 1.442695
  %v1270 = vpow.pop %v1269
  %v1271 = vmul.f32 %v1145, 1.442695
  %v1272 = vpow.pop %v1271
  %v1273 = vmul.f32 %v1146, 1.442695
  %v1274 = vpow.pop %v1273
  %v1275 = vadd.f32 %v1148, 1.0
  %v1276 = vadd.f32 %v1150, 1.0
  %v1277 = vadd.f32 %v1152, 1.0
  %v1278 = vadd.f32 %v1154, 1.0
  %v1279 = vadd.f32 %v1156, 1.0
  %v1280 = vadd.f32 %v1158, 1.0
  %v1281 = vadd.f32 %v1160, 1.0
  %v1282 = vadd.f32 %v1162, 1.0
  %v1283 = vadd.f32 %v1164, 1.0
  %v1284 = vadd.f32 %v1166, 1.0
  %v1285 = vadd.f32 %v1168, 1.0
  %v1286 = vadd.f32 %v1170, 1.0
  %v1287 = vadd.f32 %v1172, 1.0
  %v1288 = vadd.f32 %v1174, 1.0
  %v1289 = vadd.f32 %v1176, 1.0
  %v1290 = vadd.f32 %v1178, 1.0
  %v1291 = vadd.f32 %v1180, 1.0
  %v1292 = vadd.f32 %v1182, 1.0
  %v1293 = vadd.f32 %v1184, 1.0
  %v1294 = vadd.f32 %v1186, 1.0
  %v1295 = vadd.f32 %v1188, 1.0
  %v1296 = vadd.f32 %v1190, 1.0
  %v1297 = vadd.f32 %v1192, 1.0
  %v1298 = vadd.f32 %v1194, 1.0
  %v1299 = vadd.f32 %v1196, 1.0
  %v1300 = vadd.f32 %v1198, 1.0
  %v1301 = vadd.f32 %v1200, 1.0
  %v1302 = vadd.f32 %v1202, 1.0
  %v1303 = vadd.f32 %v1204, 1.0
  %v1304 = vadd.f32 %v1206, 1.0
  %v1305 = vadd.f32 %v1208, 1.0
  %v1306 = vadd.f32 %v1210, 1.0
  %v1307 = vadd.f32 %v1212, 1.0
  %v1308 = vadd.f32 %v1214, 1.0
  %v1309 = vadd.f32 %v1216, 1.0
  %v1310 = vadd.f32 %v1218, 1.0
  %v1311 = vadd.f32 %v1220, 1.0
  %v1312 = vadd.f32 %v1222, 1.0
  %v1313 = vadd.f32 %v1224, 1.0
  %v1314 = vadd.f32 %v1226, 1.0
  %v1315 = vadd.f32 %v1228, 1.0
  %v1316 = vadd.f32 %v1230, 1.0
  %v1317 = vadd.f32 %v1232, 1.0
  %v1318 = vadd.f32 %v1234, 1.0
  %v1319 = vadd.f32 %v1236, 1.0
  %v1320 = vadd.f32 %v1238, 1.0
  %v1321 = vadd.f32 %v1240, 1.0
  %v1322 = vadd.f32 %v1242, 1.0
  %v1323 = vadd.f32 %v1244, 1.0
  %v1324 = vadd.f32 %v1246, 1.0
  %v1325 = vadd.f32 %v1248, 1.0
  %v1326 = vadd.f32 %v1250, 1.0
  %v1327 = vadd.f32 %v1252, 1.0
  %v1328 = vadd.f32 %v1254, 1.0
  %v1329 = vadd.f32 %v1256, 1.0
  %v1330 = vadd.f32 %v1258, 1.0
  %v1331 = vadd.f32 %v1260, 1.0
  %v1332 = vadd.f32 %v1262, 1.0
  %v1333 = vadd.f32 %v1264, 1.0
  %v1334 = vadd.f32 %v1266, 1.0
  %v1335 = vadd.f32 %v1268, 1.0
  %v1336 = vadd.f32 %v1270, 1.0
  %v1337 = vadd.f32 %v1272, 1.0
  %v1338 = vadd.f32 %v1274, 1.0
  %v1339 = vrcp.pop %v1275
  %v1340 = vmul.f32 %v1275, %v1339
  %v1341 = vsub.f32 1.0, %v1340
  %v1342 = vmul.f32 %v1339, %v1341
  %v1343 = vadd.f32 %v1339, %v1342
  %vm1344 = vweird.f32 %v1275
  %vm1345 = vweird.f32 %v1339
  %vm1346 = vmor %vm1344, %vm1345
  %v1347 = vsel %vm1346, %v1339, %v1343
  %v1348 = vand.u32 2147483647, %v1275
  %vm1349 = vcmp.eq.f32.partialorder %v1348, 8.507059e+37
  %v1350 = vand.u32 %v1275, 2147483648
  %v1351 = vor.u32 1.1754944e-38, %v1350
  %v1352 = vsel %vm1349, %v1351, %v1347
  %v1353 = vmul.f32 1.0, %v1352
  %v1354 = vrcp.pop %v1276
  %v1355 = vmul.f32 %v1276, %v1354
  %v1356 = vsub.f32 1.0, %v1355
  %v1357 = vmul.f32 %v1354, %v1356
  %v1358 = vadd.f32 %v1354, %v1357
  %vm1359 = vweird.f32 %v1276
  %vm1360 = vweird.f32 %v1354
  %vm1361 = vmor %vm1359, %vm1360
  %v1362 = vsel %vm1361, %v1354, %v1358
  %v1363 = vand.u32 2147483647, %v1276
  %vm1364 = vcmp.eq.f32.partialorder %v1363, 8.507059e+37
  %v1365 = vand.u32 %v1276, 2147483648
  %v1366 = vor.u32 1.1754944e-38, %v1365
  %v1367 = vsel %vm1364, %v1366, %v1362
  %v1368 = vmul.f32 1.0, %v1367
  %v1369 = vrcp.pop %v1277
  %v1370 = vmul.f32 %v1277, %v1369
  %v1371 = vsub.f32 1.0, %v1370
  %v1372 = vmul.f32 %v1369, %v1371
  %v1373 = vadd.f32 %v1369, %v1372
  %vm1374 = vweird.f32 %v1277
  %vm1375 = vweird.f32 %v1369
  %vm1376 = vmor %vm1374, %vm1375
  %v1377 = vsel %vm1376, %v1369, %v1373
  %v1378 = vand.u32 2147483647, %v1277
  %vm1379 = vcmp.eq.f32.partialorder %v1378, 8.507059e+37
  %v1380 = vand.u32 %v1277, 2147483648
  %v1381 = vor.u32 1.1754944e-38, %v1380
  %v1382 = vsel %vm1379, %v1381, %v1377
  %v1383 = vmul.f32 1.0, %v1382
  %v1384 = vrcp.pop %v1278
  %v1385 = vmul.f32 %v1278, %v1384
  %v1386 = vsub.f32 1.0, %v1385
  %v1387 = vmul.f32 %v1384, %v1386
  %v1388 = vadd.f32 %v1384, %v1387
  %vm1389 = vweird.f32 %v1278
  %vm1390 = vweird.f32 %v1384
  %vm1391 = vmor %vm1389, %vm1390
  %v1392 = vsel %vm1391, %v1384, %v1388
  %v1393 = vand.u32 2147483647, %v1278
  %vm1394 = vcmp.eq.f32.partialorder %v1393, 8.507059e+37
  %v1395 = vand.u32 %v1278, 2147483648
  %v1396 = vor.u32 1.1754944e-38, %v1395
  %v1397 = vsel %vm1394, %v1396, %v1392
  %v1398 = vmul.f32 1.0, %v1397
  %v1399 = vrcp.pop %v1279
  %v1400 = vmul.f32 %v1279, %v1399
  %v1401 = vsub.f32 1.0, %v1400
  %v1402 = vmul.f32 %v1399, %v1401
  %v1403 = vadd.f32 %v1399, %v1402
  %vm1404 = vweird.f32 %v1279
  %vm1405 = vweird.f32 %v1399
  %vm1406 = vmor %vm1404, %vm1405
  %v1407 = vsel %vm1406, %v1399, %v1403
  %v1408 = vand.u32 2147483647, %v1279
  %vm1409 = vcmp.eq.f32.partialorder %v1408, 8.507059e+37
  %v1410 = vand.u32 %v1279, 2147483648
  %v1411 = vor.u32 1.1754944e-38, %v1410
  %v1412 = vsel %vm1409, %v1411, %v1407
  %v1413 = vmul.f32 1.0, %v1412
  %v1414 = vrcp.pop %v1280
  %v1415 = vmul.f32 %v1280, %v1414
  %v1416 = vsub.f32 1.0, %v1415
  %v1417 = vmul.f32 %v1414, %v1416
  %v1418 = vadd.f32 %v1414, %v1417
  %vm1419 = vweird.f32 %v1280
  %vm1420 = vweird.f32 %v1414
  %vm1421 = vmor %vm1419, %vm1420
  %v1422 = vsel %vm1421, %v1414, %v1418
  %v1423 = vand.u32 2147483647, %v1280
  %vm1424 = vcmp.eq.f32.partialorder %v1423, 8.507059e+37
  %v1425 = vand.u32 %v1280, 2147483648
  %v1426 = vor.u32 1.1754944e-38, %v1425
  %v1427 = vsel %vm1424, %v1426, %v1422
  %v1428 = vmul.f32 1.0, %v1427
  %v1429 = vrcp.pop %v1281
  %v1430 = vmul.f32 %v1281, %v1429
  %v1431 = vsub.f32 1.0, %v1430
  %v1432 = vmul.f32 %v1429, %v1431
  %v1433 = vadd.f32 %v1429, %v1432
  %vm1434 = vweird.f32 %v1281
  %vm1435 = vweird.f32 %v1429
  %vm1436 = vmor %vm1434, %vm1435
  %v1437 = vsel %vm1436, %v1429, %v1433
  %v1438 = vand.u32 2147483647, %v1281
  %vm1439 = vcmp.eq.f32.partialorder %v1438, 8.507059e+37
  %v1440 = vand.u32 %v1281, 2147483648
  %v1441 = vor.u32 1.1754944e-38, %v1440
  %v1442 = vsel %vm1439, %v1441, %v1437
  %v1443 = vmul.f32 1.0, %v1442
  %v1444 = vrcp.pop %v1282
  %v1445 = vmul.f32 %v1282, %v1444
  %v1446 = vsub.f32 1.0, %v1445
  %v1447 = vmul.f32 %v1444, %v1446
  %v1448 = vadd.f32 %v1444, %v1447
  %vm1449 = vweird.f32 %v1282
  %vm1450 = vweird.f32 %v1444
  %vm1451 = vmor %vm1449, %vm1450
  %v1452 = vsel %vm1451, %v1444, %v1448
  %v1453 = vand.u32 2147483647, %v1282
  %vm1454 = vcmp.eq.f32.partialorder %v1453, 8.507059e+37
  %v1455 = vand.u32 %v1282, 2147483648
  %v1456 = vor.u32 1.1754944e-38, %v1455
  %v1457 = vsel %vm1454, %v1456, %v1452
  %v1458 = vmul.f32 1.0, %v1457
  %v1459 = vrcp.pop %v1283
  %v1460 = vmul.f32 %v1283, %v1459
  %v1461 = vsub.f32 1.0, %v1460
  %v1462 = vmul.f32 %v1459, %v1461
  %v1463 = vadd.f32 %v1459, %v1462
  %vm1464 = vweird.f32 %v1283
  %vm1465 = vweird.f32 %v1459
  %vm1466 = vmor %vm1464, %vm1465
  %v1467 = vsel %vm1466, %v1459, %v1463
  %v1468 = vand.u32 2147483647, %v1283
  %vm1469 = vcmp.eq.f32.partialorder %v1468, 8.507059e+37
  %v1470 = vand.u32 %v1283, 2147483648
  %v1471 = vor.u32 1.1754944e-38, %v1470
  %v1472 = vsel %vm1469, %v1471, %v1467
  %v1473 = vmul.f32 1.0, %v1472
  %v1474 = vrcp.pop %v1284
  %v1475 = vmul.f32 %v1284, %v1474
  %v1476 = vsub.f32 1.0, %v1475
  %v1477 = vmul.f32 %v1474, %v1476
  %v1478 = vadd.f32 %v1474, %v1477
  %vm1479 = vweird.f32 %v1284
  %vm1480 = vweird.f32 %v1474
  %vm1481 = vmor %vm1479, %vm1480
  %v1482 = vsel %vm1481, %v1474, %v1478
  %v1483 = vand.u32 2147483647, %v1284
  %vm1484 = vcmp.eq.f32.partialorder %v1483, 8.507059e+37
  %v1485 = vand.u32 %v1284, 2147483648
  %v1486 = vor.u32 1.1754944e-38, %v1485
  %v1487 = vsel %vm1484, %v1486, %v1482
  %v1488 = vmul.f32 1.0, %v1487
  %v1489 = vrcp.pop %v1285
  %v1490 = vmul.f32 %v1285, %v1489
  %v1491 = vsub.f32 1.0, %v1490
  %v1492 = vmul.f32 %v1489, %v1491
  %v1493 = vadd.f32 %v1489, %v1492
  %vm1494 = vweird.f32 %v1285
  %vm1495 = vweird.f32 %v1489
  %vm1496 = vmor %vm1494, %vm1495
  %v1497 = vsel %vm1496, %v1489, %v1493
  %v1498 = vand.u32 2147483647, %v1285
  %vm1499 = vcmp.eq.f32.partialorder %v1498, 8.507059e+37
  %v1500 = vand.u32 %v1285, 2147483648
  %v1501 = vor.u32 1.1754944e-38, %v1500
  %v1502 = vsel %vm1499, %v1501, %v1497
  %v1503 = vmul.f32 1.0, %v1502
  %v1504 = vrcp.pop %v1286
  %v1505 = vmul.f32 %v1286, %v1504
  %v1506 = vsub.f32 1.0, %v1505
  %v1507 = vmul.f32 %v1504, %v1506
  %v1508 = vadd.f32 %v1504, %v1507
  %vm1509 = vweird.f32 %v1286
  %vm1510 = vweird.f32 %v1504
  %vm1511 = vmor %vm1509, %vm1510
  %v1512 = vsel %vm1511, %v1504, %v1508
  %v1513 = vand.u32 2147483647, %v1286
  %vm1514 = vcmp.eq.f32.partialorder %v1513, 8.507059e+37
  %v1515 = vand.u32 %v1286, 2147483648
  %v1516 = vor.u32 1.1754944e-38, %v1515
  %v1517 = vsel %vm1514, %v1516, %v1512
  %v1518 = vmul.f32 1.0, %v1517
  %v1519 = vrcp.pop %v1287
  %v1520 = vmul.f32 %v1287, %v1519
  %v1521 = vsub.f32 1.0, %v1520
  %v1522 = vmul.f32 %v1519, %v1521
  %v1523 = vadd.f32 %v1519, %v1522
  %vm1524 = vweird.f32 %v1287
  %vm1525 = vweird.f32 %v1519
  %vm1526 = vmor %vm1524, %vm1525
  %v1527 = vsel %vm1526, %v1519, %v1523
  %v1528 = vand.u32 2147483647, %v1287
  %vm1529 = vcmp.eq.f32.partialorder %v1528, 8.507059e+37
  %v1530 = vand.u32 %v1287, 2147483648
  %v1531 = vor.u32 1.1754944e-38, %v1530
  %v1532 = vsel %vm1529, %v1531, %v1527
  %v1533 = vmul.f32 1.0, %v1532
  %v1534 = vrcp.pop %v1288
  %v1535 = vmul.f32 %v1288, %v1534
  %v1536 = vsub.f32 1.0, %v1535
  %v1537 = vmul.f32 %v1534, %v1536
  %v1538 = vadd.f32 %v1534, %v1537
  %vm1539 = vweird.f32 %v1288
  %vm1540 = vweird.f32 %v1534
  %vm1541 = vmor %vm1539, %vm1540
  %v1542 = vsel %vm1541, %v1534, %v1538
  %v1543 = vand.u32 2147483647, %v1288
  %vm1544 = vcmp.eq.f32.partialorder %v1543, 8.507059e+37
  %v1545 = vand.u32 %v1288, 2147483648
  %v1546 = vor.u32 1.1754944e-38, %v1545
  %v1547 = vsel %vm1544, %v1546, %v1542
  %v1548 = vmul.f32 1.0, %v1547
  %v1549 = vrcp.pop %v1289
  %v1550 = vmul.f32 %v1289, %v1549
  %v1551 = vsub.f32 1.0, %v1550
  %v1552 = vmul.f32 %v1549, %v1551
  %v1553 = vadd.f32 %v1549, %v1552
  %vm1554 = vweird.f32 %v1289
  %vm1555 = vweird.f32 %v1549
  %vm1556 = vmor %vm1554, %vm1555
  %v1557 = vsel %vm1556, %v1549, %v1553
  %v1558 = vand.u32 2147483647, %v1289
  %vm1559 = vcmp.eq.f32.partialorder %v1558, 8.507059e+37
  %v1560 = vand.u32 %v1289, 2147483648
  %v1561 = vor.u32 1.1754944e-38, %v1560
  %v1562 = vsel %vm1559, %v1561, %v1557
  %v1563 = vmul.f32 1.0, %v1562
  %v1564 = vrcp.pop %v1290
  %v1565 = vmul.f32 %v1290, %v1564
  %v1566 = vsub.f32 1.0, %v1565
  %v1567 = vmul.f32 %v1564, %v1566
  %v1568 = vadd.f32 %v1564, %v1567
  %vm1569 = vweird.f32 %v1290
  %vm1570 = vweird.f32 %v1564
  %vm1571 = vmor %vm1569, %vm1570
  %v1572 = vsel %vm1571, %v1564, %v1568
  %v1573 = vand.u32 2147483647, %v1290
  %vm1574 = vcmp.eq.f32.partialorder %v1573, 8.507059e+37
  %v1575 = vand.u32 %v1290, 2147483648
  %v1576 = vor.u32 1.1754944e-38, %v1575
  %v1577 = vsel %vm1574, %v1576, %v1572
  %v1578 = vmul.f32 1.0, %v1577
  %v1579 = vrcp.pop %v1291
  %v1580 = vmul.f32 %v1291, %v1579
  %v1581 = vsub.f32 1.0, %v1580
  %v1582 = vmul.f32 %v1579, %v1581
  %v1583 = vadd.f32 %v1579, %v1582
  %vm1584 = vweird.f32 %v1291
  %vm1585 = vweird.f32 %v1579
  %vm1586 = vmor %vm1584, %vm1585
  %v1587 = vsel %vm1586, %v1579, %v1583
  %v1588 = vand.u32 2147483647, %v1291
  %vm1589 = vcmp.eq.f32.partialorder %v1588, 8.507059e+37
  %v1590 = vand.u32 %v1291, 2147483648
  %v1591 = vor.u32 1.1754944e-38, %v1590
  %v1592 = vsel %vm1589, %v1591, %v1587
  %v1593 = vmul.f32 1.0, %v1592
  %v1594 = vrcp.pop %v1292
  %v1595 = vmul.f32 %v1292, %v1594
  %v1596 = vsub.f32 1.0, %v1595
  %v1597 = vmul.f32 %v1594, %v1596
  %v1598 = vadd.f32 %v1594, %v1597
  %vm1599 = vweird.f32 %v1292
  %vm1600 = vweird.f32 %v1594
  %vm1601 = vmor %vm1599, %vm1600
  %v1602 = vsel %vm1601, %v1594, %v1598
  %v1603 = vand.u32 2147483647, %v1292
  %vm1604 = vcmp.eq.f32.partialorder %v1603, 8.507059e+37
  %v1605 = vand.u32 %v1292, 2147483648
  %v1606 = vor.u32 1.1754944e-38, %v1605
  %v1607 = vsel %vm1604, %v1606, %v1602
  %v1608 = vmul.f32 1.0, %v1607
  %v1609 = vrcp.pop %v1293
  %v1610 = vmul.f32 %v1293, %v1609
  %v1611 = vsub.f32 1.0, %v1610
  %v1612 = vmul.f32 %v1609, %v1611
  %v1613 = vadd.f32 %v1609, %v1612
  %vm1614 = vweird.f32 %v1293
  %vm1615 = vweird.f32 %v1609
  %vm1616 = vmor %vm1614, %vm1615
  %v1617 = vsel %vm1616, %v1609, %v1613
  %v1618 = vand.u32 2147483647, %v1293
  %vm1619 = vcmp.eq.f32.partialorder %v1618, 8.507059e+37
  %v1620 = vand.u32 %v1293, 2147483648
  %v1621 = vor.u32 1.1754944e-38, %v1620
  %v1622 = vsel %vm1619, %v1621, %v1617
  %v1623 = vmul.f32 1.0, %v1622
  %v1624 = vrcp.pop %v1294
  %v1625 = vmul.f32 %v1294, %v1624
  %v1626 = vsub.f32 1.0, %v1625
  %v1627 = vmul.f32 %v1624, %v1626
  %v1628 = vadd.f32 %v1624, %v1627
  %vm1629 = vweird.f32 %v1294
  %vm1630 = vweird.f32 %v1624
  %vm1631 = vmor %vm1629, %vm1630
  %v1632 = vsel %vm1631, %v1624, %v1628
  %v1633 = vand.u32 2147483647, %v1294
  %vm1634 = vcmp.eq.f32.partialorder %v1633, 8.507059e+37
  %v1635 = vand.u32 %v1294, 2147483648
  %v1636 = vor.u32 1.1754944e-38, %v1635
  %v1637 = vsel %vm1634, %v1636, %v1632
  %v1638 = vmul.f32 1.0, %v1637
  %v1639 = vrcp.pop %v1295
  %v1640 = vmul.f32 %v1295, %v1639
  %v1641 = vsub.f32 1.0, %v1640
  %v1642 = vmul.f32 %v1639, %v1641
  %v1643 = vadd.f32 %v1639, %v1642
  %vm1644 = vweird.f32 %v1295
  %vm1645 = vweird.f32 %v1639
  %vm1646 = vmor %vm1644, %vm1645
  %v1647 = vsel %vm1646, %v1639, %v1643
  %v1648 = vand.u32 2147483647, %v1295
  %vm1649 = vcmp.eq.f32.partialorder %v1648, 8.507059e+37
  %v1650 = vand.u32 %v1295, 2147483648
  %v1651 = vor.u32 1.1754944e-38, %v1650
  %v1652 = vsel %vm1649, %v1651, %v1647
  %v1653 = vmul.f32 1.0, %v1652
  %v1654 = vrcp.pop %v1296
  %v1655 = vmul.f32 %v1296, %v1654
  %v1656 = vsub.f32 1.0, %v1655
  %v1657 = vmul.f32 %v1654, %v1656
  %v1658 = vadd.f32 %v1654, %v1657
  %vm1659 = vweird.f32 %v1296
  %vm1660 = vweird.f32 %v1654
  %vm1661 = vmor %vm1659, %vm1660
  %v1662 = vsel %vm1661, %v1654, %v1658
  %v1663 = vand.u32 2147483647, %v1296
  %vm1664 = vcmp.eq.f32.partialorder %v1663, 8.507059e+37
  %v1665 = vand.u32 %v1296, 2147483648
  %v1666 = vor.u32 1.1754944e-38, %v1665
  %v1667 = vsel %vm1664, %v1666, %v1662
  %v1668 = vmul.f32 1.0, %v1667
  %v1669 = vrcp.pop %v1297
  %v1670 = vmul.f32 %v1297, %v1669
  %v1671 = vsub.f32 1.0, %v1670
  %v1672 = vmul.f32 %v1669, %v1671
  %v1673 = vadd.f32 %v1669, %v1672
  %vm1674 = vweird.f32 %v1297
  %vm1675 = vweird.f32 %v1669
  %vm1676 = vmor %vm1674, %vm1675
  %v1677 = vsel %vm1676, %v1669, %v1673
  %v1678 = vand.u32 2147483647, %v1297
  %vm1679 = vcmp.eq.f32.partialorder %v1678, 8.507059e+37
  %v1680 = vand.u32 %v1297, 2147483648
  %v1681 = vor.u32 1.1754944e-38, %v1680
  %v1682 = vsel %vm1679, %v1681, %v1677
  %v1683 = vmul.f32 1.0, %v1682
  %v1684 = vrcp.pop %v1298
  %v1685 = vmul.f32 %v1298, %v1684
  %v1686 = vsub.f32 1.0, %v1685
  %v1687 = vmul.f32 %v1684, %v1686
  %v1688 = vadd.f32 %v1684, %v1687
  %vm1689 = vweird.f32 %v1298
  %vm1690 = vweird.f32 %v1684
  %vm1691 = vmor %vm1689, %vm1690
  %v1692 = vsel %vm1691, %v1684, %v1688
  %v1693 = vand.u32 2147483647, %v1298
  %vm1694 = vcmp.eq.f32.partialorder %v1693, 8.507059e+37
  %v1695 = vand.u32 %v1298, 2147483648
  %v1696 = vor.u32 1.1754944e-38, %v1695
  %v1697 = vsel %vm1694, %v1696, %v1692
  %v1698 = vmul.f32 1.0, %v1697
  %v1699 = vrcp.pop %v1299
  %v1700 = vmul.f32 %v1299, %v1699
  %v1701 = vsub.f32 1.0, %v1700
  %v1702 = vmul.f32 %v1699, %v1701
  %v1703 = vadd.f32 %v1699, %v1702
  %vm1704 = vweird.f32 %v1299
  %vm1705 = vweird.f32 %v1699
  %vm1706 = vmor %vm1704, %vm1705
  %v1707 = vsel %vm1706, %v1699, %v1703
  %v1708 = vand.u32 2147483647, %v1299
  %vm1709 = vcmp.eq.f32.partialorder %v1708, 8.507059e+37
  %v1710 = vand.u32 %v1299, 2147483648
  %v1711 = vor.u32 1.1754944e-38, %v1710
  %v1712 = vsel %vm1709, %v1711, %v1707
  %v1713 = vmul.f32 1.0, %v1712
  %v1714 = vrcp.pop %v1300
  %v1715 = vmul.f32 %v1300, %v1714
  %v1716 = vsub.f32 1.0, %v1715
  %v1717 = vmul.f32 %v1714, %v1716
  %v1718 = vadd.f32 %v1714, %v1717
  %vm1719 = vweird.f32 %v1300
  %vm1720 = vweird.f32 %v1714
  %vm1721 = vmor %vm1719, %vm1720
  %v1722 = vsel %vm1721, %v1714, %v1718
  %v1723 = vand.u32 2147483647, %v1300
  %vm1724 = vcmp.eq.f32.partialorder %v1723, 8.507059e+37
  %v1725 = vand.u32 %v1300, 2147483648
  %v1726 = vor.u32 1.1754944e-38, %v1725
  %v1727 = vsel %vm1724, %v1726, %v1722
  %v1728 = vmul.f32 1.0, %v1727
  %v1729 = vrcp.pop %v1301
  %v1730 = vmul.f32 %v1301, %v1729
  %v1731 = vsub.f32 1.0, %v1730
  %v1732 = vmul.f32 %v1729, %v1731
  %v1733 = vadd.f32 %v1729, %v1732
  %vm1734 = vweird.f32 %v1301
  %vm1735 = vweird.f32 %v1729
  %vm1736 = vmor %vm1734, %vm1735
  %v1737 = vsel %vm1736, %v1729, %v1733
  %v1738 = vand.u32 2147483647, %v1301
  %vm1739 = vcmp.eq.f32.partialorder %v1738, 8.507059e+37
  %v1740 = vand.u32 %v1301, 2147483648
  %v1741 = vor.u32 1.1754944e-38, %v1740
  %v1742 = vsel %vm1739, %v1741, %v1737
  %v1743 = vmul.f32 1.0, %v1742
  %v1744 = vrcp.pop %v1302
  %v1745 = vmul.f32 %v1302, %v1744
  %v1746 = vsub.f32 1.0, %v1745
  %v1747 = vmul.f32 %v1744, %v1746
  %v1748 = vadd.f32 %v1744, %v1747
  %vm1749 = vweird.f32 %v1302
  %vm1750 = vweird.f32 %v1744
  %vm1751 = vmor %vm1749, %vm1750
  %v1752 = vsel %vm1751, %v1744, %v1748
  %v1753 = vand.u32 2147483647, %v1302
  %vm1754 = vcmp.eq.f32.partialorder %v1753, 8.507059e+37
  %v1755 = vand.u32 %v1302, 2147483648
  %v1756 = vor.u32 1.1754944e-38, %v1755
  %v1757 = vsel %vm1754, %v1756, %v1752
  %v1758 = vmul.f32 1.0, %v1757
  %v1759 = vrcp.pop %v1303
  %v1760 = vmul.f32 %v1303, %v1759
  %v1761 = vsub.f32 1.0, %v1760
  %v1762 = vmul.f32 %v1759, %v1761
  %v1763 = vadd.f32 %v1759, %v1762
  %vm1764 = vweird.f32 %v1303
  %vm1765 = vweird.f32 %v1759
  %vm1766 = vmor %vm1764, %vm1765
  %v1767 = vsel %vm1766, %v1759, %v1763
  %v1768 = vand.u32 2147483647, %v1303
  %vm1769 = vcmp.eq.f32.partialorder %v1768, 8.507059e+37
  %v1770 = vand.u32 %v1303, 2147483648
  %v1771 = vor.u32 1.1754944e-38, %v1770
  %v1772 = vsel %vm1769, %v1771, %v1767
  %v1773 = vmul.f32 1.0, %v1772
  %v1774 = vrcp.pop %v1304
  %v1775 = vmul.f32 %v1304, %v1774
  %v1776 = vsub.f32 1.0, %v1775
  %v1777 = vmul.f32 %v1774, %v1776
  %v1778 = vadd.f32 %v1774, %v1777
  %vm1779 = vweird.f32 %v1304
  %vm1780 = vweird.f32 %v1774
  %vm1781 = vmor %vm1779, %vm1780
  %v1782 = vsel %vm1781, %v1774, %v1778
  %v1783 = vand.u32 2147483647, %v1304
  %vm1784 = vcmp.eq.f32.partialorder %v1783, 8.507059e+37
  %v1785 = vand.u32 %v1304, 2147483648
  %v1786 = vor.u32 1.1754944e-38, %v1785
  %v1787 = vsel %vm1784, %v1786, %v1782
  %v1788 = vmul.f32 1.0, %v1787
  %v1789 = vrcp.pop %v1305
  %v1790 = vmul.f32 %v1305, %v1789
  %v1791 = vsub.f32 1.0, %v1790
  %v1792 = vmul.f32 %v1789, %v1791
  %v1793 = vadd.f32 %v1789, %v1792
  %vm1794 = vweird.f32 %v1305
  %vm1795 = vweird.f32 %v1789
  %vm1796 = vmor %vm1794, %vm1795
  %v1797 = vsel %vm1796, %v1789, %v1793
  %v1798 = vand.u32 2147483647, %v1305
  %vm1799 = vcmp.eq.f32.partialorder %v1798, 8.507059e+37
  %v1800 = vand.u32 %v1305, 2147483648
  %v1801 = vor.u32 1.1754944e-38, %v1800
  %v1802 = vsel %vm1799, %v1801, %v1797
  %v1803 = vmul.f32 1.0, %v1802
  %v1804 = vrcp.pop %v1306
  %v1805 = vmul.f32 %v1306, %v1804
  %v1806 = vsub.f32 1.0, %v1805
  %v1807 = vmul.f32 %v1804, %v1806
  %v1808 = vadd.f32 %v1804, %v1807
  %vm1809 = vweird.f32 %v1306
  %vm1810 = vweird.f32 %v1804
  %vm1811 = vmor %vm1809, %vm1810
  %v1812 = vsel %vm1811, %v1804, %v1808
  %v1813 = vand.u32 2147483647, %v1306
  %vm1814 = vcmp.eq.f32.partialorder %v1813, 8.507059e+37
  %v1815 = vand.u32 %v1306, 2147483648
  %v1816 = vor.u32 1.1754944e-38, %v1815
  %v1817 = vsel %vm1814, %v1816, %v1812
  %v1818 = vmul.f32 1.0, %v1817
  %v1819 = vrcp.pop %v1307
  %v1820 = vmul.f32 %v1307, %v1819
  %v1821 = vsub.f32 1.0, %v1820
  %v1822 = vmul.f32 %v1819, %v1821
  %v1823 = vadd.f32 %v1819, %v1822
  %vm1824 = vweird.f32 %v1307
  %vm1825 = vweird.f32 %v1819
  %vm1826 = vmor %vm1824, %vm1825
  %v1827 = vsel %vm1826, %v1819, %v1823
  %v1828 = vand.u32 2147483647, %v1307
  %vm1829 = vcmp.eq.f32.partialorder %v1828, 8.507059e+37
  %v1830 = vand.u32 %v1307, 2147483648
  %v1831 = vor.u32 1.1754944e-38, %v1830
  %v1832 = vsel %vm1829, %v1831, %v1827
  %v1833 = vmul.f32 1.0, %v1832
  %v1834 = vrcp.pop %v1308
  %v1835 = vmul.f32 %v1308, %v1834
  %v1836 = vsub.f32 1.0, %v1835
  %v1837 = vmul.f32 %v1834, %v1836
  %v1838 = vadd.f32 %v1834, %v1837
  %vm1839 = vweird.f32 %v1308
  %vm1840 = vweird.f32 %v1834
  %vm1841 = vmor %vm1839, %vm1840
  %v1842 = vsel %vm1841, %v1834, %v1838
  %v1843 = vand.u32 2147483647, %v1308
  %vm1844 = vcmp.eq.f32.partialorder %v1843, 8.507059e+37
  %v1845 = vand.u32 %v1308, 2147483648
  %v1846 = vor.u32 1.1754944e-38, %v1845
  %v1847 = vsel %vm1844, %v1846, %v1842
  %v1848 = vmul.f32 1.0, %v1847
  %v1849 = vrcp.pop %v1309
  %v1850 = vmul.f32 %v1309, %v1849
  %v1851 = vsub.f32 1.0, %v1850
  %v1852 = vmul.f32 %v1849, %v1851
  %v1853 = vadd.f32 %v1849, %v1852
  %vm1854 = vweird.f32 %v1309
  %vm1855 = vweird.f32 %v1849
  %vm1856 = vmor %vm1854, %vm1855
  %v1857 = vsel %vm1856, %v1849, %v1853
  %v1858 = vand.u32 2147483647, %v1309
  %vm1859 = vcmp.eq.f32.partialorder %v1858, 8.507059e+37
  %v1860 = vand.u32 %v1309, 2147483648
  %v1861 = vor.u32 1.1754944e-38, %v1860
  %v1862 = vsel %vm1859, %v1861, %v1857
  %v1863 = vmul.f32 1.0, %v1862
  %v1864 = vrcp.pop %v1310
  %v1865 = vmul.f32 %v1310, %v1864
  %v1866 = vsub.f32 1.0, %v1865
  %v1867 = vmul.f32 %v1864, %v1866
  %v1868 = vadd.f32 %v1864, %v1867
  %vm1869 = vweird.f32 %v1310
  %vm1870 = vweird.f32 %v1864
  %vm1871 = vmor %vm1869, %vm1870
  %v1872 = vsel %vm1871, %v1864, %v1868
  %v1873 = vand.u32 2147483647, %v1310
  %vm1874 = vcmp.eq.f32.partialorder %v1873, 8.507059e+37
  %v1875 = vand.u32 %v1310, 2147483648
  %v1876 = vor.u32 1.1754944e-38, %v1875
  %v1877 = vsel %vm1874, %v1876, %v1872
  %v1878 = vmul.f32 1.0, %v1877
  %v1879 = vrcp.pop %v1311
  %v1880 = vmul.f32 %v1311, %v1879
  %v1881 = vsub.f32 1.0, %v1880
  %v1882 = vmul.f32 %v1879, %v1881
  %v1883 = vadd.f32 %v1879, %v1882
  %vm1884 = vweird.f32 %v1311
  %vm1885 = vweird.f32 %v1879
  %vm1886 = vmor %vm1884, %vm1885
  %v1887 = vsel %vm1886, %v1879, %v1883
  %v1888 = vand.u32 2147483647, %v1311
  %vm1889 = vcmp.eq.f32.partialorder %v1888, 8.507059e+37
  %v1890 = vand.u32 %v1311, 2147483648
  %v1891 = vor.u32 1.1754944e-38, %v1890
  %v1892 = vsel %vm1889, %v1891, %v1887
  %v1893 = vmul.f32 1.0, %v1892
  %v1894 = vrcp.pop %v1312
  %v1895 = vmul.f32 %v1312, %v1894
  %v1896 = vsub.f32 1.0, %v1895
  %v1897 = vmul.f32 %v1894, %v1896
  %v1898 = vadd.f32 %v1894, %v1897
  %vm1899 = vweird.f32 %v1312
  %vm1900 = vweird.f32 %v1894
  %vm1901 = vmor %vm1899, %vm1900
  %v1902 = vsel %vm1901, %v1894, %v1898
  %v1903 = vand.u32 2147483647, %v1312
  %vm1904 = vcmp.eq.f32.partialorder %v1903, 8.507059e+37
  %v1905 = vand.u32 %v1312, 2147483648
  %v1906 = vor.u32 1.1754944e-38, %v1905
  %v1907 = vsel %vm1904, %v1906, %v1902
  %v1908 = vmul.f32 1.0, %v1907
  %v1909 = vrcp.pop %v1313
  %v1910 = vmul.f32 %v1313, %v1909
  %v1911 = vsub.f32 1.0, %v1910
  %v1912 = vmul.f32 %v1909, %v1911
  %v1913 = vadd.f32 %v1909, %v1912
  %vm1914 = vweird.f32 %v1313
  %vm1915 = vweird.f32 %v1909
  %vm1916 = vmor %vm1914, %vm1915
  %v1917 = vsel %vm1916, %v1909, %v1913
  %v1918 = vand.u32 2147483647, %v1313
  %vm1919 = vcmp.eq.f32.partialorder %v1918, 8.507059e+37
  %v1920 = vand.u32 %v1313, 2147483648
  %v1921 = vor.u32 1.1754944e-38, %v1920
  %v1922 = vsel %vm1919, %v1921, %v1917
  %v1923 = vmul.f32 1.0, %v1922
  %v1924 = vrcp.pop %v1314
  %v1925 = vmul.f32 %v1314, %v1924
  %v1926 = vsub.f32 1.0, %v1925
  %v1927 = vmul.f32 %v1924, %v1926
  %v1928 = vadd.f32 %v1924, %v1927
  %vm1929 = vweird.f32 %v1314
  %vm1930 = vweird.f32 %v1924
  %vm1931 = vmor %vm1929, %vm1930
  %v1932 = vsel %vm1931, %v1924, %v1928
  %v1933 = vand.u32 2147483647, %v1314
  %vm1934 = vcmp.eq.f32.partialorder %v1933, 8.507059e+37
  %v1935 = vand.u32 %v1314, 2147483648
  %v1936 = vor.u32 1.1754944e-38, %v1935
  %v1937 = vsel %vm1934, %v1936, %v1932
  %v1938 = vmul.f32 1.0, %v1937
  %v1939 = vrcp.pop %v1315
  %v1940 = vmul.f32 %v1315, %v1939
  %v1941 = vsub.f32 1.0, %v1940
  %v1942 = vmul.f32 %v1939, %v1941
  %v1943 = vadd.f32 %v1939, %v1942
  %vm1944 = vweird.f32 %v1315
  %vm1945 = vweird.f32 %v1939
  %vm1946 = vmor %vm1944, %vm1945
  %v1947 = vsel %vm1946, %v1939, %v1943
  %v1948 = vand.u32 2147483647, %v1315
  %vm1949 = vcmp.eq.f32.partialorder %v1948, 8.507059e+37
  %v1950 = vand.u32 %v1315, 2147483648
  %v1951 = vor.u32 1.1754944e-38, %v1950
  %v1952 = vsel %vm1949, %v1951, %v1947
  %v1953 = vmul.f32 1.0, %v1952
  %v1954 = vrcp.pop %v1316
  %v1955 = vmul.f32 %v1316, %v1954
  %v1956 = vsub.f32 1.0, %v1955
  %v1957 = vmul.f32 %v1954, %v1956
  %v1958 = vadd.f32 %v1954, %v1957
  %vm1959 = vweird.f32 %v1316
  %vm1960 = vweird.f32 %v1954
  %vm1961 = vmor %vm1959, %vm1960
  %v1962 = vsel %vm1961, %v1954, %v1958
  %v1963 = vand.u32 2147483647, %v1316
  %vm1964 = vcmp.eq.f32.partialorder %v1963, 8.507059e+37
  %v1965 = vand.u32 %v1316, 2147483648
  %v1966 = vor.u32 1.1754944e-38, %v1965
  %v1967 = vsel %vm1964, %v1966, %v1962
  %v1968 = vmul.f32 1.0, %v1967
  %v1969 = vrcp.pop %v1317
  %v1970 = vmul.f32 %v1317, %v1969
  %v1971 = vsub.f32 1.0, %v1970
  %v1972 = vmul.f32 %v1969, %v1971
  %v1973 = vadd.f32 %v1969, %v1972
  %vm1974 = vweird.f32 %v1317
  %vm1975 = vweird.f32 %v1969
  %vm1976 = vmor %vm1974, %vm1975
  %v1977 = vsel %vm1976, %v1969, %v1973
  %v1978 = vand.u32 2147483647, %v1317
  %vm1979 = vcmp.eq.f32.partialorder %v1978, 8.507059e+37
  %v1980 = vand.u32 %v1317, 2147483648
  %v1981 = vor.u32 1.1754944e-38, %v1980
  %v1982 = vsel %vm1979, %v1981, %v1977
  %v1983 = vmul.f32 1.0, %v1982
  %v1984 = vrcp.pop %v1318
  %v1985 = vmul.f32 %v1318, %v1984
  %v1986 = vsub.f32 1.0, %v1985
  %v1987 = vmul.f32 %v1984, %v1986
  %v1988 = vadd.f32 %v1984, %v1987
  %vm1989 = vweird.f32 %v1318
  %vm1990 = vweird.f32 %v1984
  %vm1991 = vmor %vm1989, %vm1990
  %v1992 = vsel %vm1991, %v1984, %v1988
  %v1993 = vand.u32 2147483647, %v1318
  %vm1994 = vcmp.eq.f32.partialorder %v1993, 8.507059e+37
  %v1995 = vand.u32 %v1318, 2147483648
  %v1996 = vor.u32 1.1754944e-38, %v1995
  %v1997 = vsel %vm1994, %v1996, %v1992
  %v1998 = vmul.f32 1.0, %v1997
  %v1999 = vrcp.pop %v1319
  %v2000 = vmul.f32 %v1319, %v1999
  %v2001 = vsub.f32 1.0, %v2000
  %v2002 = vmul.f32 %v1999, %v2001
  %v2003 = vadd.f32 %v1999, %v2002
  %vm2004 = vweird.f32 %v1319
  %vm2005 = vweird.f32 %v1999
  %vm2006 = vmor %vm2004, %vm2005
  %v2007 = vsel %vm2006, %v1999, %v2003
  %v2008 = vand.u32 2147483647, %v1319
  %vm2009 = vcmp.eq.f32.partialorder %v2008, 8.507059e+37
  %v2010 = vand.u32 %v1319, 2147483648
  %v2011 = vor.u32 1.1754944e-38, %v2010
  %v2012 = vsel %vm2009, %v2011, %v2007
  %v2013 = vmul.f32 1.0, %v2012
  %v2014 = vrcp.pop %v1320
  %v2015 = vmul.f32 %v1320, %v2014
  %v2016 = vsub.f32 1.0, %v2015
  %v2017 = vmul.f32 %v2014, %v2016
  %v2018 = vadd.f32 %v2014, %v2017
  %vm2019 = vweird.f32 %v1320
  %vm2020 = vweird.f32 %v2014
  %vm2021 = vmor %vm2019, %vm2020
  %v2022 = vsel %vm2021, %v2014, %v2018
  %v2023 = vand.u32 2147483647, %v1320
  %vm2024 = vcmp.eq.f32.partialorder %v2023, 8.507059e+37
  %v2025 = vand.u32 %v1320, 2147483648
  %v2026 = vor.u32 1.1754944e-38, %v2025
  %v2027 = vsel %vm2024, %v2026, %v2022
  %v2028 = vmul.f32 1.0, %v2027
  %v2029 = vrcp.pop %v1321
  %v2030 = vmul.f32 %v1321, %v2029
  %v2031 = vsub.f32 1.0, %v2030
  %v2032 = vmul.f32 %v2029, %v2031
  %v2033 = vadd.f32 %v2029, %v2032
  %vm2034 = vweird.f32 %v1321
  %vm2035 = vweird.f32 %v2029
  %vm2036 = vmor %vm2034, %vm2035
  %v2037 = vsel %vm2036, %v2029, %v2033
  %v2038 = vand.u32 2147483647, %v1321
  %vm2039 = vcmp.eq.f32.partialorder %v2038, 8.507059e+37
  %v2040 = vand.u32 %v1321, 2147483648
  %v2041 = vor.u32 1.1754944e-38, %v2040
  %v2042 = vsel %vm2039, %v2041, %v2037
  %v2043 = vmul.f32 1.0, %v2042
  %v2044 = vrcp.pop %v1322
  %v2045 = vmul.f32 %v1322, %v2044
  %v2046 = vsub.f32 1.0, %v2045
  %v2047 = vmul.f32 %v2044, %v2046
  %v2048 = vadd.f32 %v2044, %v2047
  %vm2049 = vweird.f32 %v1322
  %vm2050 = vweird.f32 %v2044
  %vm2051 = vmor %vm2049, %vm2050
  %v2052 = vsel %vm2051, %v2044, %v2048
  %v2053 = vand.u32 2147483647, %v1322
  %vm2054 = vcmp.eq.f32.partialorder %v2053, 8.507059e+37
  %v2055 = vand.u32 %v1322, 2147483648
  %v2056 = vor.u32 1.1754944e-38, %v2055
  %v2057 = vsel %vm2054, %v2056, %v2052
  %v2058 = vmul.f32 1.0, %v2057
  %v2059 = vrcp.pop %v1323
  %v2060 = vmul.f32 %v1323, %v2059
  %v2061 = vsub.f32 1.0, %v2060
  %v2062 = vmul.f32 %v2059, %v2061
  %v2063 = vadd.f32 %v2059, %v2062
  %vm2064 = vweird.f32 %v1323
  %vm2065 = vweird.f32 %v2059
  %vm2066 = vmor %vm2064, %vm2065
  %v2067 = vsel %vm2066, %v2059, %v2063
  %v2068 = vand.u32 2147483647, %v1323
  %vm2069 = vcmp.eq.f32.partialorder %v2068, 8.507059e+37
  %v2070 = vand.u32 %v1323, 2147483648
  %v2071 = vor.u32 1.1754944e-38, %v2070
  %v2072 = vsel %vm2069, %v2071, %v2067
  %v2073 = vmul.f32 1.0, %v2072
  %v2074 = vrcp.pop %v1324
  %v2075 = vmul.f32 %v1324, %v2074
  %v2076 = vsub.f32 1.0, %v2075
  %v2077 = vmul.f32 %v2074, %v2076
  %v2078 = vadd.f32 %v2074, %v2077
  %vm2079 = vweird.f32 %v1324
  %vm2080 = vweird.f32 %v2074
  %vm2081 = vmor %vm2079, %vm2080
  %v2082 = vsel %vm2081, %v2074, %v2078
  %v2083 = vand.u32 2147483647, %v1324
  %vm2084 = vcmp.eq.f32.partialorder %v2083, 8.507059e+37
  %v2085 = vand.u32 %v1324, 2147483648
  %v2086 = vor.u32 1.1754944e-38, %v2085
  %v2087 = vsel %vm2084, %v2086, %v2082
  %v2088 = vmul.f32 1.0, %v2087
  %v2089 = vrcp.pop %v1325
  %v2090 = vmul.f32 %v1325, %v2089
  %v2091 = vsub.f32 1.0, %v2090
  %v2092 = vmul.f32 %v2089, %v2091
  %v2093 = vadd.f32 %v2089, %v2092
  %vm2094 = vweird.f32 %v1325
  %vm2095 = vweird.f32 %v2089
  %vm2096 = vmor %vm2094, %vm2095
  %v2097 = vsel %vm2096, %v2089, %v2093
  %v2098 = vand.u32 2147483647, %v1325
  %vm2099 = vcmp.eq.f32.partialorder %v2098, 8.507059e+37
  %v2100 = vand.u32 %v1325, 2147483648
  %v2101 = vor.u32 1.1754944e-38, %v2100
  %v2102 = vsel %vm2099, %v2101, %v2097
  %v2103 = vmul.f32 1.0, %v2102
  %v2104 = vrcp.pop %v1326
  %v2105 = vmul.f32 %v1326, %v2104
  %v2106 = vsub.f32 1.0, %v2105
  %v2107 = vmul.f32 %v2104, %v2106
  %v2108 = vadd.f32 %v2104, %v2107
  %vm2109 = vweird.f32 %v1326
  %vm2110 = vweird.f32 %v2104
  %vm2111 = vmor %vm2109, %vm2110
  %v2112 = vsel %vm2111, %v2104, %v2108
  %v2113 = vand.u32 2147483647, %v1326
  %vm2114 = vcmp.eq.f32.partialorder %v2113, 8.507059e+37
  %v2115 = vand.u32 %v1326, 2147483648
  %v2116 = vor.u32 1.1754944e-38, %v2115
  %v2117 = vsel %vm2114, %v2116, %v2112
  %v2118 = vmul.f32 1.0, %v2117
  %v2119 = vrcp.pop %v1327
  %v2120 = vmul.f32 %v1327, %v2119
  %v2121 = vsub.f32 1.0, %v2120
  %v2122 = vmul.f32 %v2119, %v2121
  %v2123 = vadd.f32 %v2119, %v2122
  %vm2124 = vweird.f32 %v1327
  %vm2125 = vweird.f32 %v2119
  %vm2126 = vmor %vm2124, %vm2125
  %v2127 = vsel %vm2126, %v2119, %v2123
  %v2128 = vand.u32 2147483647, %v1327
  %vm2129 = vcmp.eq.f32.partialorder %v2128, 8.507059e+37
  %v2130 = vand.u32 %v1327, 2147483648
  %v2131 = vor.u32 1.1754944e-38, %v2130
  %v2132 = vsel %vm2129, %v2131, %v2127
  %v2133 = vmul.f32 1.0, %v2132
  %v2134 = vrcp.pop %v1328
  %v2135 = vmul.f32 %v1328, %v2134
  %v2136 = vsub.f32 1.0, %v2135
  %v2137 = vmul.f32 %v2134, %v2136
  %v2138 = vadd.f32 %v2134, %v2137
  %vm2139 = vweird.f32 %v1328
  %vm2140 = vweird.f32 %v2134
  %vm2141 = vmor %vm2139, %vm2140
  %v2142 = vsel %vm2141, %v2134, %v2138
  %v2143 = vand.u32 2147483647, %v1328
  %vm2144 = vcmp.eq.f32.partialorder %v2143, 8.507059e+37
  %v2145 = vand.u32 %v1328, 2147483648
  %v2146 = vor.u32 1.1754944e-38, %v2145
  %v2147 = vsel %vm2144, %v2146, %v2142
  %v2148 = vmul.f32 1.0, %v2147
  %v2149 = vrcp.pop %v1329
  %v2150 = vmul.f32 %v1329, %v2149
  %v2151 = vsub.f32 1.0, %v2150
  %v2152 = vmul.f32 %v2149, %v2151
  %v2153 = vadd.f32 %v2149, %v2152
  %vm2154 = vweird.f32 %v1329
  %vm2155 = vweird.f32 %v2149
  %vm2156 = vmor %vm2154, %vm2155
  %v2157 = vsel %vm2156, %v2149, %v2153
  %v2158 = vand.u32 2147483647, %v1329
  %vm2159 = vcmp.eq.f32.partialorder %v2158, 8.507059e+37
  %v2160 = vand.u32 %v1329, 2147483648
  %v2161 = vor.u32 1.1754944e-38, %v2160
  %v2162 = vsel %vm2159, %v2161, %v2157
  %v2163 = vmul.f32 1.0, %v2162
  %v2164 = vrcp.pop %v1330
  %v2165 = vmul.f32 %v1330, %v2164
  %v2166 = vsub.f32 1.0, %v2165
  %v2167 = vmul.f32 %v2164, %v2166
  %v2168 = vadd.f32 %v2164, %v2167
  %vm2169 = vweird.f32 %v1330
  %vm2170 = vweird.f32 %v2164
  %vm2171 = vmor %vm2169, %vm2170
  %v2172 = vsel %vm2171, %v2164, %v2168
  %v2173 = vand.u32 2147483647, %v1330
  %vm2174 = vcmp.eq.f32.partialorder %v2173, 8.507059e+37
  %v2175 = vand.u32 %v1330, 2147483648
  %v2176 = vor.u32 1.1754944e-38, %v2175
  %v2177 = vsel %vm2174, %v2176, %v2172
  %v2178 = vmul.f32 1.0, %v2177
  %v2179 = vrcp.pop %v1331
  %v2180 = vmul.f32 %v1331, %v2179
  %v2181 = vsub.f32 1.0, %v2180
  %v2182 = vmul.f32 %v2179, %v2181
  %v2183 = vadd.f32 %v2179, %v2182
  %vm2184 = vweird.f32 %v1331
  %vm2185 = vweird.f32 %v2179
  %vm2186 = vmor %vm2184, %vm2185
  %v2187 = vsel %vm2186, %v2179, %v2183
  %v2188 = vand.u32 2147483647, %v1331
  %vm2189 = vcmp.eq.f32.partialorder %v2188, 8.507059e+37
  %v2190 = vand.u32 %v1331, 2147483648
  %v2191 = vor.u32 1.1754944e-38, %v2190
  %v2192 = vsel %vm2189, %v2191, %v2187
  %v2193 = vmul.f32 1.0, %v2192
  %v2194 = vrcp.pop %v1332
  %v2195 = vmul.f32 %v1332, %v2194
  %v2196 = vsub.f32 1.0, %v2195
  %v2197 = vmul.f32 %v2194, %v2196
  %v2198 = vadd.f32 %v2194, %v2197
  %vm2199 = vweird.f32 %v1332
  %vm2200 = vweird.f32 %v2194
  %vm2201 = vmor %vm2199, %vm2200
  %v2202 = vsel %vm2201, %v2194, %v2198
  %v2203 = vand.u32 2147483647, %v1332
  %vm2204 = vcmp.eq.f32.partialorder %v2203, 8.507059e+37
  %v2205 = vand.u32 %v1332, 2147483648
  %v2206 = vor.u32 1.1754944e-38, %v2205
  %v2207 = vsel %vm2204, %v2206, %v2202
  %v2208 = vmul.f32 1.0, %v2207
  %v2209 = vrcp.pop %v1333
  %v2210 = vmul.f32 %v1333, %v2209
  %v2211 = vsub.f32 1.0, %v2210
  %v2212 = vmul.f32 %v2209, %v2211
  %v2213 = vadd.f32 %v2209, %v2212
  %vm2214 = vweird.f32 %v1333
  %vm2215 = vweird.f32 %v2209
  %vm2216 = vmor %vm2214, %vm2215
  %v2217 = vsel %vm2216, %v2209, %v2213
  %v2218 = vand.u32 2147483647, %v1333
  %vm2219 = vcmp.eq.f32.partialorder %v2218, 8.507059e+37
  %v2220 = vand.u32 %v1333, 2147483648
  %v2221 = vor.u32 1.1754944e-38, %v2220
  %v2222 = vsel %vm2219, %v2221, %v2217
  %v2223 = vmul.f32 1.0, %v2222
  %v2224 = vrcp.pop %v1334
  %v2225 = vmul.f32 %v1334, %v2224
  %v2226 = vsub.f32 1.0, %v2225
  %v2227 = vmul.f32 %v2224, %v2226
  %v2228 = vadd.f32 %v2224, %v2227
  %vm2229 = vweird.f32 %v1334
  %vm2230 = vweird.f32 %v2224
  %vm2231 = vmor %vm2229, %vm2230
  %v2232 = vsel %vm2231, %v2224, %v2228
  %v2233 = vand.u32 2147483647, %v1334
  %vm2234 = vcmp.eq.f32.partialorder %v2233, 8.507059e+37
  %v2235 = vand.u32 %v1334, 2147483648
  %v2236 = vor.u32 1.1754944e-38, %v2235
  %v2237 = vsel %vm2234, %v2236, %v2232
  %v2238 = vmul.f32 1.0, %v2237
  %v2239 = vrcp.pop %v1335
  %v2240 = vmul.f32 %v1335, %v2239
  %v2241 = vsub.f32 1.0, %v2240
  %v2242 = vmul.f32 %v2239, %v2241
  %v2243 = vadd.f32 %v2239, %v2242
  %vm2244 = vweird.f32 %v1335
  %vm2245 = vweird.f32 %v2239
  %vm2246 = vmor %vm2244, %vm2245
  %v2247 = vsel %vm2246, %v2239, %v2243
  %v2248 = vand.u32 2147483647, %v1335
  %vm2249 = vcmp.eq.f32.partialorder %v2248, 8.507059e+37
  %v2250 = vand.u32 %v1335, 2147483648
  %v2251 = vor.u32 1.1754944e-38, %v2250
  %v2252 = vsel %vm2249, %v2251, %v2247
  %v2253 = vmul.f32 1.0, %v2252
  %v2254 = vrcp.pop %v1336
  %v2255 = vmul.f32 %v1336, %v2254
  %v2256 = vsub.f32 1.0, %v2255
  %v2257 = vmul.f32 %v2254, %v2256
  %v2258 = vadd.f32 %v2254, %v2257
  %vm2259 = vweird.f32 %v1336
  %vm2260 = vweird.f32 %v2254
  %vm2261 = vmor %vm2259, %vm2260
  %v2262 = vsel %vm2261, %v2254, %v2258
  %v2263 = vand.u32 2147483647, %v1336
  %vm2264 = vcmp.eq.f32.partialorder %v2263, 8.507059e+37
  %v2265 = vand.u32 %v1336, 2147483648
  %v2266 = vor.u32 1.1754944e-38, %v2265
  %v2267 = vsel %vm2264, %v2266, %v2262
  %v2268 = vmul.f32 1.0, %v2267
  %v2269 = vrcp.pop %v1337
  %v2270 = vmul.f32 %v1337, %v2269
  %v2271 = vsub.f32 1.0, %v2270
  %v2272 = vmul.f32 %v2269, %v2271
  %v2273 = vadd.f32 %v2269, %v2272
  %vm2274 = vweird.f32 %v1337
  %vm2275 = vweird.f32 %v2269
  %vm2276 = vmor %vm2274, %vm2275
  %v2277 = vsel %vm2276, %v2269, %v2273
  %v2278 = vand.u32 2147483647, %v1337
  %vm2279 = vcmp.eq.f32.partialorder %v2278, 8.507059e+37
  %v2280 = vand.u32 %v1337, 2147483648
  %v2281 = vor.u32 1.1754944e-38, %v2280
  %v2282 = vsel %vm2279, %v2281, %v2277
  %v2283 = vmul.f32 1.0, %v2282
  %v2284 = vrcp.pop %v1338
  %v2285 = vmul.f32 %v1338, %v2284
  %v2286 = vsub.f32 1.0, %v2285
  %v2287 = vmul.f32 %v2284, %v2286
  %v2288 = vadd.f32 %v2284, %v2287
  %vm2289 = vweird.f32 %v1338
  %vm2290 = vweird.f32 %v2284
  %vm2291 = vmor %vm2289, %vm2290
  %v2292 = vsel %vm2291, %v2284, %v2288
  %v2293 = vand.u32 2147483647, %v1338
  %vm2294 = vcmp.eq.f32.partialorder %v2293, 8.507059e+37
  %v2295 = vand.u32 %v1338, 2147483648
  %v2296 = vor.u32 1.1754944e-38, %v2295
  %v2297 = vsel %vm2294, %v2296, %v2292
  %v2298 = vmul.f32 1.0, %v2297
  %vm2299 = vcmask 7168
  %2300 = vst.msk [vmem:[%s7] sm:$0xff] %vm2299, %v1353
  %2301 = vst.msk [vmem:[%s7 + $0x8] sm:$0xff] %vm2299, %v1368
  %2302 = vst.msk [vmem:[%s7 + $0x10] sm:$0xff] %vm2299, %v1383
  %2303 = vst.msk [vmem:[%s7 + $0x18] sm:$0xff] %vm2299, %v1398
  %2304 = vst.msk [vmem:[%s7 + $0x20] sm:$0xff] %vm2299, %v1413
  %2305 = vst.msk [vmem:[%s7 + $0x28] sm:$0xff] %vm2299, %v1428
  %2306 = vst.msk [vmem:[%s7 + $0x30] sm:$0xff] %vm2299, %v1443
  %2307 = vst.msk [vmem:[%s7 + $0x38] sm:$0xff] %vm2299, %v1458
  %2308 = vst.msk [vmem:[%s7 + $0x40] sm:$0xff] %vm2299, %v1473
  %2309 = vst.msk [vmem:[%s7 + $0x48] sm:$0xff] %vm2299, %v1488
  %2310 = vst.msk [vmem:[%s7 + $0x50] sm:$0xff] %vm2299, %v1503
  %2311 = vst.msk [vmem:[%s7 + $0x58] sm:$0xff] %vm2299, %v1518
  %2312 = vst.msk [vmem:[%s7 + $0x60] sm:$0xff] %vm2299, %v1533
  %2313 = vst.msk [vmem:[%s7 + $0x68] sm:$0xff] %vm2299, %v1548
  %2314 = vst.msk [vmem:[%s7 + $0x70] sm:$0xff] %vm2299, %v1563
  %2315 = vst.msk [vmem:[%s7 + $0x78] sm:$0xff] %vm2299, %v1578
  %2316 = vst.msk [vmem:[%s7 + $0x80] sm:$0xff] %vm2299, %v1593
  %2317 = vst.msk [vmem:[%s7 + $0x88] sm:$0xff] %vm2299, %v1608
  %2318 = vst.msk [vmem:[%s7 + $0x90] sm:$0xff] %vm2299, %v1623
  %2319 = vst.msk [vmem:[%s7 + $0x98] sm:$0xff] %vm2299, %v1638
  %2320 = vst.msk [vmem:[%s7 + $0xa0] sm:$0xff] %vm2299, %v1653
  %2321 = vst.msk [vmem:[%s7 + $0xa8] sm:$0xff] %vm2299, %v1668
  %2322 = vst.msk [vmem:[%s7 + $0xb0] sm:$0xff] %vm2299, %v1683
  %2323 = vst.msk [vmem:[%s7 + $0xb8] sm:$0xff] %vm2299, %v1698
  %2324 = vst.msk [vmem:[%s7 + $0xc0] sm:$0xff] %vm2299, %v1713
  %2325 = vst.msk [vmem:[%s7 + $0xc8] sm:$0xff] %vm2299, %v1728
  %2326 = vst.msk [vmem:[%s7 + $0xd0] sm:$0xff] %vm2299, %v1743
  %2327 = vst.msk [vmem:[%s7 + $0xd8] sm:$0xff] %vm2299, %v1758
  %2328 = vst.msk [vmem:[%s7 + $0xe0] sm:$0xff] %vm2299, %v1773
  %2329 = vst.msk [vmem:[%s7 + $0xe8] sm:$0xff] %vm2299, %v1788
  %2330 = vst.msk [vmem:[%s7 + $0xf0] sm:$0xff] %vm2299, %v1803
  %2331 = vst.msk [vmem:[%s7 + $0xf8] sm:$0xff] %vm2299, %v1818
  %2332 = vst.msk [vmem:[%s7 + $0x100] sm:$0xff] %vm2299, %v1833
  %2333 = vst.msk [vmem:[%s7 + $0x108] sm:$0xff] %vm2299, %v1848
  %2334 = vst.msk [vmem:[%s7 + $0x110] sm:$0xff] %vm2299, %v1863
  %2335 = vst.msk [vmem:[%s7 + $0x118] sm:$0xff] %vm2299, %v1878
  %2336 = vst.msk [vmem:[%s7 + $0x120] sm:$0xff] %vm2299, %v1893
  %2337 = vst.msk [vmem:[%s7 + $0x128] sm:$0xff] %vm2299, %v1908
  %2338 = vst.msk [vmem:[%s7 + $0x130] sm:$0xff] %vm2299, %v1923
  %2339 = vst.msk [vmem:[%s7 + $0x138] sm:$0xff] %vm2299, %v1938
  %2340 = vst.msk [vmem:[%s7 + $0x140] sm:$0xff] %vm2299, %v1953
  %2341 = vst.msk [vmem:[%s7 + $0x148] sm:$0xff] %vm2299, %v1968
  %2342 = vst.msk [vmem:[%s7 + $0x150] sm:$0xff] %vm2299, %v1983
  %2343 = vst.msk [vmem:[%s7 + $0x158] sm:$0xff] %vm2299, %v1998
  %2344 = vst.msk [vmem:[%s7 + $0x160] sm:$0xff] %vm2299, %v2013
  %2345 = vst.msk [vmem:[%s7 + $0x168] sm:$0xff] %vm2299, %v2028
  %2346 = vst.msk [vmem:[%s7 + $0x170] sm:$0xff] %vm2299, %v2043
  %2347 = vst.msk [vmem:[%s7 + $0x178] sm:$0xff] %vm2299, %v2058
  %2348 = vst.msk [vmem:[%s7 + $0x180] sm:$0xff] %vm2299, %v2073
  %2349 = vst.msk [vmem:[%s7 + $0x188] sm:$0xff] %vm2299, %v2088
  %2350 = vst.msk [vmem:[%s7 + $0x190] sm:$0xff] %vm2299, %v2103
  %2351 = vst.msk [vmem:[%s7 + $0x198] sm:$0xff] %vm2299, %v2118
  %2352 = vst.msk [vmem:[%s7 + $0x1a0] sm:$0xff] %vm2299, %v2133
  %2353 = vst.msk [vmem:[%s7 + $0x1a8] sm:$0xff] %vm2299, %v2148
  %2354 = vst.msk [vmem:[%s7 + $0x1b0] sm:$0xff] %vm2299, %v2163
  %2355 = vst.msk [vmem:[%s7 + $0x1b8] sm:$0xff] %vm2299, %v2178
  %2356 = vst.msk [vmem:[%s7 + $0x1c0] sm:$0xff] %vm2299, %v2193
  %2357 = vst.msk [vmem:[%s7 + $0x1c8] sm:$0xff] %vm2299, %v2208
  %2358 = vst.msk [vmem:[%s7 + $0x1d0] sm:$0xff] %vm2299, %v2223
  %2359 = vst.msk [vmem:[%s7 + $0x1d8] sm:$0xff] %vm2299, %v2238
  %2360 = vst.msk [vmem:[%s7 + $0x1e0] sm:$0xff] %vm2299, %v2253
  %2361 = vst.msk [vmem:[%s7 + $0x1e8] sm:$0xff] %vm2299, %v2268
  %2362 = vst.msk [vmem:[%s7 + $0x1f0] sm:$0xff] %vm2299, %v2283
  %2363 = vst.msk [vmem:[%s7 + $0x1f8] sm:$0xff] %vm2299, %v2298
  // Predicated region
  $region30: #{discriminator_forward.1} parent=0 // pred_check
    _
  $region31: #{discriminator_forward.1} parent=0 // pred_check_branch
    %2365 = sbr.rel (0) target = $region33
  $region32: #{discriminator_forward.1} parent=0 // pred_region
    _
  $region33: #{discriminator_forward.1} parent=0 // pred_fallthru
    _
  // Predicated region
  $region34: #{discriminator_forward.1} parent=0 // pred_check
    _
  $region35: #{discriminator_forward.1} parent=0 // pred_check_branch
    %2367 = sbr.rel (0) target = $region37
  $region36: #{discriminator_forward.1} parent=0 // pred_region
    _
  $region37: #{discriminator_forward.1} parent=0 // pred_fallthru
    _

</llo_original>
